<compile_context>
chip_gen: v5e
topology: v5e:2x2
jax: 0.10.0
libtpu: 0.0.40
codegen_flags: <defaults>
</compile_context>

<pallas_src>
import math
import functools

import jax
import jax.numpy as jnp
from jax import lax
from jax.experimental import pallas as pl
from jax.experimental.pallas import tpu as pltpu

_SUBLANE = 8


def _vmem_spec():
    # Whole-array block resident in VMEM (no grid; all operands are tiny).
    return pl.BlockSpec(memory_space=pltpu.MemorySpace.VMEM)


# --------------------------- fused encoder kernel ---------------------------
def _make_encoder_kernel(num_layers, seq_len, emb_size, hidden):
    L, T, E, H = num_layers, seq_len, emb_size, hidden

    def kernel(*refs):
        # refs = (emb_ref(B_pad, T*E) f32,
        #         [w_cat_l(in_dim+H, 4H) bf16, b_l(1, 4H) f32] * L,
        #         out_ref(B_pad, 2*L*H) f32)
        emb_ref = refs[0]
        w_refs = refs[1:1 + 2 * L]
        out_ref = refs[1 + 2 * L]

        B = emb_ref.shape[0]

        # Hoist weight / bias loads out of the recurrence (VMEM -> vregs once).
        # Fine at these sizes; at H >= 128 read per-use from the refs instead.
        w_cat = [w_refs[2 * l][...] for l in range(L)]            # bf16 (in+H, 4H)
        bias = [w_refs[2 * l + 1][...] for l in range(L)]         # f32  (1, 4H)

        # Zero initial state (PyTorch default when (h0, c0) not provided).
        hs = [jnp.zeros((B, H), jnp.float32) for _ in range(L)]
        cs = [jnp.zeros((B, H), jnp.float32) for _ in range(L)]

        for t in range(T):                                        # static unroll (toy T)
            # Embedding rows were gathered in the wrapper; static lane slice.
            layer_in = emb_ref[:, t * E:(t + 1) * E]              # (B, E) f32

            for l in range(L):                                    # static unroll (toy L)
                # Fused [x, h] @ [W_ih^T ; W_hh^T] + b : one MXU push per cell.
                xh = jnp.concatenate([layer_in, hs[l]], axis=-1)  # (B, in_dim+H) f32
                gates = (jnp.dot(xh.astype(jnp.bfloat16), w_cat[l],
                                 preferred_element_type=jnp.float32)
                         + bias[l])                               # (B, 4H) f32

                # Whole-vreg activations: 2 EUP pushes instead of 4 masked ones.
                sig = jax.nn.sigmoid(gates)                       # (B, 4H)
                th = jnp.tanh(gates)                              # (B, 4H)
                i_g = sig[:, 0 * H:1 * H]
                f_g = sig[:, 1 * H:2 * H]
                o_g = sig[:, 3 * H:4 * H]
                g_g = th[:, 2 * H:3 * H]

                c_new = f_g * cs[l] + i_g * g_g                   # f32 cell math
                h_new = o_g * jnp.tanh(c_new)
                hs[l] = h_new
                cs[l] = c_new
                layer_in = h_new      # inter-layer dropout = identity (eval mode)

        # Single lane-dense store: [h_0..h_{L-1}, c_0..c_{L-1}] along lanes.
        out_ref[...] = jnp.concatenate(hs + cs, axis=-1)          # (B_pad, 2*L*H)

    return kernel


@functools.partial(jax.jit, static_argnames=("num_layers",))
def encoder_forward(params, x_tokens, num_layers):
    """Mirrors EncoderLSTM.forward (eval mode). x_tokens: (T, B) int tokens."""
    T, B = x_tokens.shape
    E = params["embedding"].shape[1]
    H = params["b_0"].shape[1] // 4

    # Wrapper-side embedding gather (no dependence on h/c -> never in the
    # recurrence, never O(V) work or O(V*E) VMEM inside the kernel).
    emb = params["embedding"][x_tokens].astype(jnp.float32)       # (T, B, E)
    emb = emb.transpose(1, 0, 2).reshape(B, T * E)                # (B, T*E) lane-dense

    # Pad batch up to a full sublane tile so no VPU/MXU rows are wasted padding.
    b_pad = max(_SUBLANE, ((B + _SUBLANE - 1) // _SUBLANE) * _SUBLANE)
    if b_pad != B:
        emb = jnp.pad(emb, ((0, b_pad - B), (0, 0)))

    args = [emb]
    for l in range(num_layers):
        args += [params[f"w_cat_{l}"], params[f"b_{l}"]]

    packed = pl.pallas_call(
        _make_encoder_kernel(num_layers, T, E, H),
        out_shape=jax.ShapeDtypeStruct((b_pad, 2 * num_layers * H), jnp.float32),
        in_specs=[_vmem_spec()] * len(args),
        out_specs=_vmem_spec(),
    )(*args)

    # Wrapper-side layout plumbing: (B, 2*L*H) -> (2, L, B, H) -> hidden, cell.
    r = packed[:B].reshape(B, 2, num_layers, H).transpose(1, 2, 0, 3)
    return r[0], r[1]


# ------------------------------- parameters ---------------------------------
def init_params(key, input_size, embedding_size, hidden_size, num_layers):
    params = {}
    keys = iter(jax.random.split(key, 1 + 4 * num_layers))
    # Embedding table stored bf16 (MXU/DMA-friendly); gathered + upcast in wrapper.
    params["embedding"] = jax.random.normal(
        next(keys), (input_size, embedding_size), jnp.float32).astype(jnp.bfloat16)

    bound = 1.0 / math.sqrt(hidden_size)

    def u(k, shape):
        return jax.random.uniform(k, shape, jnp.float32, -bound, bound)

    for l in range(num_layers):
        in_dim = embedding_size if l == 0 else hidden_size
        w_ih = u(next(keys), (4 * hidden_size, in_dim))           # PyTorch layout (4H, in)
        w_hh = u(next(keys), (4 * hidden_size, hidden_size))      # (4H, H)
        b_ih = u(next(keys), (4 * hidden_size,))
        b_hh = u(next(keys), (4 * hidden_size,))
        # Fused single-matmul weight: [W_ih^T ; W_hh^T] -> (in_dim + H, 4H), bf16.
        params[f"w_cat_{l}"] = jnp.concatenate(
            [w_ih.T, w_hh.T], axis=0).astype(jnp.bfloat16)
        params[f"b_{l}"] = (b_ih + b_hh)[None, :]                 # fused bias (1, 4H) f32
    return params


# ---------------------------- plain-JAX reference ----------------------------
def encoder_forward_ref(params, x_tokens, num_layers):
    """Same math as the kernel (bf16 MXU operands, f32 accumulate/elementwise)."""
    T, B = x_tokens.shape
    H = params["b_0"].shape[1] // 4
    emb = params["embedding"][x_tokens].astype(jnp.float32)       # (T, B, E)
    hs = [jnp.zeros((B, H), jnp.float32) for _ in range(num_layers)]
    cs = [jnp.zeros((B, H), jnp.float32) for _ in range(num_layers)]
    for t in range(T):
        layer_in = emb[t]
        for l in range(num_layers):
            xh = jnp.concatenate([layer_in, hs[l]], axis=-1)
            gates = jnp.dot(xh.astype(jnp.bfloat16), params[f"w_cat_{l}"],
                            preferred_element_type=jnp.float32) + params[f"b_{l}"]
            i_g = jax.nn.sigmoid(gates[:, 0 * H:1 * H])
            f_g = jax.nn.sigmoid(gates[:, 1 * H:2 * H])
            g_g = jnp.tanh(gates[:, 2 * H:3 * H])
            o_g = jax.nn.sigmoid(gates[:, 3 * H:4 * H])
            cs[l] = f_g * cs[l] + i_g * g_g
            hs[l] = o_g * jnp.tanh(cs[l])
            layer_in = hs[l]
    return jnp.stack(hs), jnp.stack(cs)


if __name__ == "__main__":
    # Small shapes consistent with the module's forward.
    input_size = 50       # vocab
    embedding_size = 32
    hidden_size = 32
    num_layers = 2
    dropout = 0.0         # eval-mode / identity in this forward
    seq_len = 8
    batch = 2

    key = jax.random.PRNGKey(0)
    k_params, k_x = jax.random.split(key)

    params = init_params(k_params, input_size, embedding_size, hidden_size,
                         num_layers)
    x_tokens = jax.random.randint(k_x, (seq_len, batch), 0, input_size,
                                  jnp.int32)

    hidden, cell = encoder_forward(params, x_tokens, num_layers)
    jax.block_until_ready((hidden, cell))

    # Correctness check vs. plain-JAX reference of the same math.
    h_r, c_r = encoder_forward_ref(params, x_tokens, num_layers)
    assert hidden.shape == (num_layers, batch, hidden_size)
    assert cell.shape == (num_layers, batch, hidden_size)
    assert jnp.allclose(hidden, h_r, atol=2e-4, rtol=2e-4)
    assert jnp.allclose(cell, c_r, atol=2e-4, rtol=2e-4)

    print("KERNEL_OK")
</pallas_src>

<mosaic_0001>
module attributes {stable_mosaic.version = 11 : i64} {
  func.func @kernel(%arg0: memref<8x256xf32, #tpu.memory_space<vmem>>, %arg1: memref<64x128xbf16, #tpu.memory_space<vmem>>, %arg2: memref<1x128xf32, #tpu.memory_space<vmem>>, %arg3: memref<64x128xbf16, #tpu.memory_space<vmem>>, %arg4: memref<1x128xf32, #tpu.memory_space<vmem>>, %arg5: memref<8x128xf32, #tpu.memory_space<vmem>>) attributes {dimension_semantics = [], scalar_prefetch = 0 : i64, scratch_operands = 0 : i64, tpu.core_type = #tpu.core_type<tc>} {
    %c0 = arith.constant 0 : index
    %c0_0 = arith.constant 0 : index
    %0 = vector.load %arg1[%c0, %c0_0] : memref<64x128xbf16, #tpu.memory_space<vmem>>, vector<64x128xbf16>
    %c0_1 = arith.constant 0 : index
    %c0_2 = arith.constant 0 : index
    %1 = vector.load %arg3[%c0_1, %c0_2] : memref<64x128xbf16, #tpu.memory_space<vmem>>, vector<64x128xbf16>
    %c0_3 = arith.constant 0 : index
    %c0_4 = arith.constant 0 : index
    %2 = vector.load %arg2[%c0_3, %c0_4] : memref<1x128xf32, #tpu.memory_space<vmem>>, vector<1x128xf32>
    %c0_5 = arith.constant 0 : index
    %c0_6 = arith.constant 0 : index
    %3 = vector.load %arg4[%c0_5, %c0_6] : memref<1x128xf32, #tpu.memory_space<vmem>>, vector<1x128xf32>
    %cst = arith.constant 0.000000e+00 : f32
    %4 = vector.broadcast %cst : f32 to vector<8x32xf32>
    %cst_7 = arith.constant 0.000000e+00 : f32
    %5 = vector.broadcast %cst_7 : f32 to vector<8x32xf32>
    %cst_8 = arith.constant 0.000000e+00 : f32
    %6 = vector.broadcast %cst_8 : f32 to vector<8x32xf32>
    %cst_9 = arith.constant 0.000000e+00 : f32
    %7 = vector.broadcast %cst_9 : f32 to vector<8x32xf32>
    %c0_10 = arith.constant 0 : index
    %c0_11 = arith.constant 0 : index
    %8 = vector.load %arg0[%c0_10, %c0_11] : memref<8x256xf32, #tpu.memory_space<vmem>>, vector<8x32xf32>
    %9 = tpu.concatenate %8, %4 in 1 : vector<8x32xf32>, vector<8x32xf32> -> vector<8x64xf32>
    %10 = arith.truncf %9 : vector<8x64xf32> to vector<8x64xbf16>
    %cst_12 = arith.constant dense<0.000000e+00> : vector<8x128xf32>
    %11 = tpu.matmul %10, %0, %cst_12 {dimension_numbers = #tpu.dot_dimension_numbers<[1], [0], [0], [1], [0, 0, 1, 1], [], []>} : vector<8x64xbf16>, vector<64x128xbf16>, vector<8x128xf32> -> vector<8x128xf32>
    %12 = vector.broadcast %2 : vector<1x128xf32> to vector<8x128xf32>
    %13 = arith.addf %11, %12 : vector<8x128xf32>
    %14 = arith.negf %13 : vector<8x128xf32>
    %15 = math.exp %14 : vector<8x128xf32>
    %cst_13 = arith.constant 1.000000e+00 : f32
    %16 = vector.broadcast %cst_13 : f32 to vector<8x128xf32>
    %17 = arith.addf %16, %15 : vector<8x128xf32>
    %18 = arith.divf %16, %17 : vector<8x128xf32>
    %19 = math.tanh %13 : vector<8x128xf32>
    %20 = vector.extract_strided_slice %18 {offsets = [0, 0], sizes = [8, 32], strides = [1, 1]} : vector<8x128xf32> to vector<8x32xf32>
    %21 = vector.extract_strided_slice %18 {offsets = [0, 32], sizes = [8, 32], strides = [1, 1]} : vector<8x128xf32> to vector<8x32xf32>
    %22 = vector.extract_strided_slice %18 {offsets = [0, 96], sizes = [8, 32], strides = [1, 1]} : vector<8x128xf32> to vector<8x32xf32>
    %23 = vector.extract_strided_slice %19 {offsets = [0, 64], sizes = [8, 32], strides = [1, 1]} : vector<8x128xf32> to vector<8x32xf32>
    %24 = arith.mulf %21, %6 : vector<8x32xf32>
    %25 = arith.mulf %20, %23 : vector<8x32xf32>
    %26 = arith.addf %24, %25 : vector<8x32xf32>
    %27 = math.tanh %26 : vector<8x32xf32>
    %28 = arith.mulf %22, %27 : vector<8x32xf32>
    %29 = tpu.concatenate %28, %5 in 1 : vector<8x32xf32>, vector<8x32xf32> -> vector<8x64xf32>
    %30 = arith.truncf %29 : vector<8x64xf32> to vector<8x64xbf16>
    %cst_14 = arith.constant dense<0.000000e+00> : vector<8x128xf32>
    %31 = tpu.matmul %30, %1, %cst_14 {dimension_numbers = #tpu.dot_dimension_numbers<[1], [0], [0], [1], [0, 0, 1, 1], [], []>} : vector<8x64xbf16>, vector<64x128xbf16>, vector<8x128xf32> -> vector<8x128xf32>
    %32 = vector.broadcast %3 : vector<1x128xf32> to vector<8x128xf32>
    %33 = arith.addf %31, %32 : vector<8x128xf32>
    %34 = arith.negf %33 : vector<8x128xf32>
    %35 = math.exp %34 : vector<8x128xf32>
    %cst_15 = arith.constant 1.000000e+00 : f32
    %36 = vector.broadcast %cst_15 : f32 to vector<8x128xf32>
    %37 = arith.addf %36, %35 : vector<8x128xf32>
    %38 = arith.divf %36, %37 : vector<8x128xf32>
    %39 = math.tanh %33 : vector<8x128xf32>
    %40 = vector.extract_strided_slice %38 {offsets = [0, 0], sizes = [8, 32], strides = [1, 1]} : vector<8x128xf32> to vector<8x32xf32>
    %41 = vector.extract_strided_slice %38 {offsets = [0, 32], sizes = [8, 32], strides = [1, 1]} : vector<8x128xf32> to vector<8x32xf32>
    %42 = vector.extract_strided_slice %38 {offsets = [0, 96], sizes = [8, 32], strides = [1, 1]} : vector<8x128xf32> to vector<8x32xf32>
    %43 = vector.extract_strided_slice %39 {offsets = [0, 64], sizes = [8, 32], strides = [1, 1]} : vector<8x128xf32> to vector<8x32xf32>
    %44 = arith.mulf %41, %7 : vector<8x32xf32>
    %45 = arith.mulf %40, %43 : vector<8x32xf32>
    %46 = arith.addf %44, %45 : vector<8x32xf32>
    %47 = math.tanh %46 : vector<8x32xf32>
    %48 = arith.mulf %42, %47 : vector<8x32xf32>
    %c0_16 = arith.constant 0 : index
    %c32 = arith.constant 32 : index
    %49 = vector.load %arg0[%c0_16, %c32] : memref<8x256xf32, #tpu.memory_space<vmem>>, vector<8x32xf32>
    %50 = tpu.concatenate %49, %28 in 1 : vector<8x32xf32>, vector<8x32xf32> -> vector<8x64xf32>
    %51 = arith.truncf %50 : vector<8x64xf32> to vector<8x64xbf16>
    %cst_17 = arith.constant dense<0.000000e+00> : vector<8x128xf32>
    %52 = tpu.matmul %51, %0, %cst_17 {dimension_numbers = #tpu.dot_dimension_numbers<[1], [0], [0], [1], [0, 0, 1, 1], [], []>} : vector<8x64xbf16>, vector<64x128xbf16>, vector<8x128xf32> -> vector<8x128xf32>
    %53 = vector.broadcast %2 : vector<1x128xf32> to vector<8x128xf32>
    %54 = arith.addf %52, %53 : vector<8x128xf32>
    %55 = arith.negf %54 : vector<8x128xf32>
    %56 = math.exp %55 : vector<8x128xf32>
    %cst_18 = arith.constant 1.000000e+00 : f32
    %57 = vector.broadcast %cst_18 : f32 to vector<8x128xf32>
    %58 = arith.addf %57, %56 : vector<8x128xf32>
    %59 = arith.divf %57, %58 : vector<8x128xf32>
    %60 = math.tanh %54 : vector<8x128xf32>
    %61 = vector.extract_strided_slice %59 {offsets = [0, 0], sizes = [8, 32], strides = [1, 1]} : vector<8x128xf32> to vector<8x32xf32>
    %62 = vector.extract_strided_slice %59 {offsets = [0, 32], sizes = [8, 32], strides = [1, 1]} : vector<8x128xf32> to vector<8x32xf32>
    %63 = vector.extract_strided_slice %59 {offsets = [0, 96], sizes = [8, 32], strides = [1, 1]} : vector<8x128xf32> to vector<8x32xf32>
    %64 = vector.extract_strided_slice %60 {offsets = [0, 64], sizes = [8, 32], strides = [1, 1]} : vector<8x128xf32> to vector<8x32xf32>
    %65 = arith.mulf %62, %26 : vector<8x32xf32>
    %66 = arith.mulf %61, %64 : vector<8x32xf32>
    %67 = arith.addf %65, %66 : vector<8x32xf32>
    %68 = math.tanh %67 : vector<8x32xf32>
    %69 = arith.mulf %63, %68 : vector<8x32xf32>
    %70 = tpu.concatenate %69, %48 in 1 : vector<8x32xf32>, vector<8x32xf32> -> vector<8x64xf32>
    %71 = arith.truncf %70 : vector<8x64xf32> to vector<8x64xbf16>
    %cst_19 = arith.constant dense<0.000000e+00> : vector<8x128xf32>
    %72 = tpu.matmul %71, %1, %cst_19 {dimension_numbers = #tpu.dot_dimension_numbers<[1], [0], [0], [1], [0, 0, 1, 1], [], []>} : vector<8x64xbf16>, vector<64x128xbf16>, vector<8x128xf32> -> vector<8x128xf32>
    %73 = vector.broadcast %3 : vector<1x128xf32> to vector<8x128xf32>
    %74 = arith.addf %72, %73 : vector<8x128xf32>
    %75 = arith.negf %74 : vector<8x128xf32>
    %76 = math.exp %75 : vector<8x128xf32>
    %cst_20 = arith.constant 1.000000e+00 : f32
    %77 = vector.broadcast %cst_20 : f32 to vector<8x128xf32>
    %78 = arith.addf %77, %76 : vector<8x128xf32>
    %79 = arith.divf %77, %78 : vector<8x128xf32>
    %80 = math.tanh %74 : vector<8x128xf32>
    %81 = vector.extract_strided_slice %79 {offsets = [0, 0], sizes = [8, 32], strides = [1, 1]} : vector<8x128xf32> to vector<8x32xf32>
    %82 = vector.extract_strided_slice %79 {offsets = [0, 32], sizes = [8, 32], strides = [1, 1]} : vector<8x128xf32> to vector<8x32xf32>
    %83 = vector.extract_strided_slice %79 {offsets = [0, 96], sizes = [8, 32], strides = [1, 1]} : vector<8x128xf32> to vector<8x32xf32>
    %84 = vector.extract_strided_slice %80 {offsets = [0, 64], sizes = [8, 32], strides = [1, 1]} : vector<8x128xf32> to vector<8x32xf32>
    %85 = arith.mulf %82, %46 : vector<8x32xf32>
    %86 = arith.mulf %81, %84 : vector<8x32xf32>
    %87 = arith.addf %85, %86 : vector<8x32xf32>
    %88 = math.tanh %87 : vector<8x32xf32>
    %89 = arith.mulf %83, %88 : vector<8x32xf32>
    %c0_21 = arith.constant 0 : index
    %c64 = arith.constant 64 : index
    %90 = vector.load %arg0[%c0_21, %c64] : memref<8x256xf32, #tpu.memory_space<vmem>>, vector<8x32xf32>
    %91 = tpu.concatenate %90, %69 in 1 : vector<8x32xf32>, vector<8x32xf32> -> vector<8x64xf32>
    %92 = arith.truncf %91 : vector<8x64xf32> to vector<8x64xbf16>
    %cst_22 = arith.constant dense<0.000000e+00> : vector<8x128xf32>
    %93 = tpu.matmul %92, %0, %cst_22 {dimension_numbers = #tpu.dot_dimension_numbers<[1], [0], [0], [1], [0, 0, 1, 1], [], []>} : vector<8x64xbf16>, vector<64x128xbf16>, vector<8x128xf32> -> vector<8x128xf32>
    %94 = vector.broadcast %2 : vector<1x128xf32> to vector<8x128xf32>
    %95 = arith.addf %93, %94 : vector<8x128xf32>
    %96 = arith.negf %95 : vector<8x128xf32>
    %97 = math.exp %96 : vector<8x128xf32>
    %cst_23 = arith.constant 1.000000e+00 : f32
    %98 = vector.broadcast %cst_23 : f32 to vector<8x128xf32>
    %99 = arith.addf %98, %97 : vector<8x128xf32>
    %100 = arith.divf %98, %99 : vector<8x128xf32>
    %101 = math.tanh %95 : vector<8x128xf32>
    %102 = vector.extract_strided_slice %100 {offsets = [0, 0], sizes = [8, 32], strides = [1, 1]} : vector<8x128xf32> to vector<8x32xf32>
    %103 = vector.extract_strided_slice %100 {offsets = [0, 32], sizes = [8, 32], strides = [1, 1]} : vector<8x128xf32> to vector<8x32xf32>
    %104 = vector.extract_strided_slice %100 {offsets = [0, 96], sizes = [8, 32], strides = [1, 1]} : vector<8x128xf32> to vector<8x32xf32>
    %105 = vector.extract_strided_slice %101 {offsets = [0, 64], sizes = [8, 32], strides = [1, 1]} : vector<8x128xf32> to vector<8x32xf32>
    %106 = arith.mulf %103, %67 : vector<8x32xf32>
    %107 = arith.mulf %102, %105 : vector<8x32xf32>
    %108 = arith.addf %106, %107 : vector<8x32xf32>
    %109 = math.tanh %108 : vector<8x32xf32>
    %110 = arith.mulf %104, %109 : vector<8x32xf32>
    %111 = tpu.concatenate %110, %89 in 1 : vector<8x32xf32>, vector<8x32xf32> -> vector<8x64xf32>
    %112 = arith.truncf %111 : vector<8x64xf32> to vector<8x64xbf16>
    %cst_24 = arith.constant dense<0.000000e+00> : vector<8x128xf32>
    %113 = tpu.matmul %112, %1, %cst_24 {dimension_numbers = #tpu.dot_dimension_numbers<[1], [0], [0], [1], [0, 0, 1, 1], [], []>} : vector<8x64xbf16>, vector<64x128xbf16>, vector<8x128xf32> -> vector<8x128xf32>
    %114 = vector.broadcast %3 : vector<1x128xf32> to vector<8x128xf32>
    %115 = arith.addf %113, %114 : vector<8x128xf32>
    %116 = arith.negf %115 : vector<8x128xf32>
    %117 = math.exp %116 : vector<8x128xf32>
    %cst_25 = arith.constant 1.000000e+00 : f32
    %118 = vector.broadcast %cst_25 : f32 to vector<8x128xf32>
    %119 = arith.addf %118, %117 : vector<8x128xf32>
    %120 = arith.divf %118, %119 : vector<8x128xf32>
    %121 = math.tanh %115 : vector<8x128xf32>
    %122 = vector.extract_strided_slice %120 {offsets = [0, 0], sizes = [8, 32], strides = [1, 1]} : vector<8x128xf32> to vector<8x32xf32>
    %123 = vector.extract_strided_slice %120 {offsets = [0, 32], sizes = [8, 32], strides = [1, 1]} : vector<8x128xf32> to vector<8x32xf32>
    %124 = vector.extract_strided_slice %120 {offsets = [0, 96], sizes = [8, 32], strides = [1, 1]} : vector<8x128xf32> to vector<8x32xf32>
    %125 = vector.extract_strided_slice %121 {offsets = [0, 64], sizes = [8, 32], strides = [1, 1]} : vector<8x128xf32> to vector<8x32xf32>
    %126 = arith.mulf %123, %87 : vector<8x32xf32>
    %127 = arith.mulf %122, %125 : vector<8x32xf32>
    %128 = arith.addf %126, %127 : vector<8x32xf32>
    %129 = math.tanh %128 : vector<8x32xf32>
    %130 = arith.mulf %124, %129 : vector<8x32xf32>
    %c0_26 = arith.constant 0 : index
    %c96 = arith.constant 96 : index
    %131 = vector.load %arg0[%c0_26, %c96] : memref<8x256xf32, #tpu.memory_space<vmem>>, vector<8x32xf32>
    %132 = tpu.concatenate %131, %110 in 1 : vector<8x32xf32>, vector<8x32xf32> -> vector<8x64xf32>
    %133 = arith.truncf %132 : vector<8x64xf32> to vector<8x64xbf16>
    %cst_27 = arith.constant dense<0.000000e+00> : vector<8x128xf32>
    %134 = tpu.matmul %133, %0, %cst_27 {dimension_numbers = #tpu.dot_dimension_numbers<[1], [0], [0], [1], [0, 0, 1, 1], [], []>} : vector<8x64xbf16>, vector<64x128xbf16>, vector<8x128xf32> -> vector<8x128xf32>
    %135 = vector.broadcast %2 : vector<1x128xf32> to vector<8x128xf32>
    %136 = arith.addf %134, %135 : vector<8x128xf32>
    %137 = arith.negf %136 : vector<8x128xf32>
    %138 = math.exp %137 : vector<8x128xf32>
    %cst_28 = arith.constant 1.000000e+00 : f32
    %139 = vector.broadcast %cst_28 : f32 to vector<8x128xf32>
    %140 = arith.addf %139, %138 : vector<8x128xf32>
    %141 = arith.divf %139, %140 : vector<8x128xf32>
    %142 = math.tanh %136 : vector<8x128xf32>
    %143 = vector.extract_strided_slice %141 {offsets = [0, 0], sizes = [8, 32], strides = [1, 1]} : vector<8x128xf32> to vector<8x32xf32>
    %144 = vector.extract_strided_slice %141 {offsets = [0, 32], sizes = [8, 32], strides = [1, 1]} : vector<8x128xf32> to vector<8x32xf32>
    %145 = vector.extract_strided_slice %141 {offsets = [0, 96], sizes = [8, 32], strides = [1, 1]} : vector<8x128xf32> to vector<8x32xf32>
    %146 = vector.extract_strided_slice %142 {offsets = [0, 64], sizes = [8, 32], strides = [1, 1]} : vector<8x128xf32> to vector<8x32xf32>
    %147 = arith.mulf %144, %108 : vector<8x32xf32>
    %148 = arith.mulf %143, %146 : vector<8x32xf32>
    %149 = arith.addf %147, %148 : vector<8x32xf32>
    %150 = math.tanh %149 : vector<8x32xf32>
    %151 = arith.mulf %145, %150 : vector<8x32xf32>
    %152 = tpu.concatenate %151, %130 in 1 : vector<8x32xf32>, vector<8x32xf32> -> vector<8x64xf32>
    %153 = arith.truncf %152 : vector<8x64xf32> to vector<8x64xbf16>
    %cst_29 = arith.constant dense<0.000000e+00> : vector<8x128xf32>
    %154 = tpu.matmul %153, %1, %cst_29 {dimension_numbers = #tpu.dot_dimension_numbers<[1], [0], [0], [1], [0, 0, 1, 1], [], []>} : vector<8x64xbf16>, vector<64x128xbf16>, vector<8x128xf32> -> vector<8x128xf32>
    %155 = vector.broadcast %3 : vector<1x128xf32> to vector<8x128xf32>
    %156 = arith.addf %154, %155 : vector<8x128xf32>
    %157 = arith.negf %156 : vector<8x128xf32>
    %158 = math.exp %157 : vector<8x128xf32>
    %cst_30 = arith.constant 1.000000e+00 : f32
    %159 = vector.broadcast %cst_30 : f32 to vector<8x128xf32>
    %160 = arith.addf %159, %158 : vector<8x128xf32>
    %161 = arith.divf %159, %160 : vector<8x128xf32>
    %162 = math.tanh %156 : vector<8x128xf32>
    %163 = vector.extract_strided_slice %161 {offsets = [0, 0], sizes = [8, 32], strides = [1, 1]} : vector<8x128xf32> to vector<8x32xf32>
    %164 = vector.extract_strided_slice %161 {offsets = [0, 32], sizes = [8, 32], strides = [1, 1]} : vector<8x128xf32> to vector<8x32xf32>
    %165 = vector.extract_strided_slice %161 {offsets = [0, 96], sizes = [8, 32], strides = [1, 1]} : vector<8x128xf32> to vector<8x32xf32>
    %166 = vector.extract_strided_slice %162 {offsets = [0, 64], sizes = [8, 32], strides = [1, 1]} : vector<8x128xf32> to vector<8x32xf32>
    %167 = arith.mulf %164, %128 : vector<8x32xf32>
    %168 = arith.mulf %163, %166 : vector<8x32xf32>
    %169 = arith.addf %167, %168 : vector<8x32xf32>
    %170 = math.tanh %169 : vector<8x32xf32>
    %171 = arith.mulf %165, %170 : vector<8x32xf32>
    %c0_31 = arith.constant 0 : index
    %c128 = arith.constant 128 : index
    %172 = vector.load %arg0[%c0_31, %c128] : memref<8x256xf32, #tpu.memory_space<vmem>>, vector<8x32xf32>
    %173 = tpu.concatenate %172, %151 in 1 : vector<8x32xf32>, vector<8x32xf32> -> vector<8x64xf32>
    %174 = arith.truncf %173 : vector<8x64xf32> to vector<8x64xbf16>
    %cst_32 = arith.constant dense<0.000000e+00> : vector<8x128xf32>
    %175 = tpu.matmul %174, %0, %cst_32 {dimension_numbers = #tpu.dot_dimension_numbers<[1], [0], [0], [1], [0, 0, 1, 1], [], []>} : vector<8x64xbf16>, vector<64x128xbf16>, vector<8x128xf32> -> vector<8x128xf32>
    %176 = vector.broadcast %2 : vector<1x128xf32> to vector<8x128xf32>
    %177 = arith.addf %175, %176 : vector<8x128xf32>
    %178 = arith.negf %177 : vector<8x128xf32>
    %179 = math.exp %178 : vector<8x128xf32>
    %cst_33 = arith.constant 1.000000e+00 : f32
    %180 = vector.broadcast %cst_33 : f32 to vector<8x128xf32>
    %181 = arith.addf %180, %179 : vector<8x128xf32>
    %182 = arith.divf %180, %181 : vector<8x128xf32>
    %183 = math.tanh %177 : vector<8x128xf32>
    %184 = vector.extract_strided_slice %182 {offsets = [0, 0], sizes = [8, 32], strides = [1, 1]} : vector<8x128xf32> to vector<8x32xf32>
    %185 = vector.extract_strided_slice %182 {offsets = [0, 32], sizes = [8, 32], strides = [1, 1]} : vector<8x128xf32> to vector<8x32xf32>
    %186 = vector.extract_strided_slice %182 {offsets = [0, 96], sizes = [8, 32], strides = [1, 1]} : vector<8x128xf32> to vector<8x32xf32>
    %187 = vector.extract_strided_slice %183 {offsets = [0, 64], sizes = [8, 32], strides = [1, 1]} : vector<8x128xf32> to vector<8x32xf32>
    %188 = arith.mulf %185, %149 : vector<8x32xf32>
    %189 = arith.mulf %184, %187 : vector<8x32xf32>
    %190 = arith.addf %188, %189 : vector<8x32xf32>
    %191 = math.tanh %190 : vector<8x32xf32>
    %192 = arith.mulf %186, %191 : vector<8x32xf32>
    %193 = tpu.concatenate %192, %171 in 1 : vector<8x32xf32>, vector<8x32xf32> -> vector<8x64xf32>
    %194 = arith.truncf %193 : vector<8x64xf32> to vector<8x64xbf16>
    %cst_34 = arith.constant dense<0.000000e+00> : vector<8x128xf32>
    %195 = tpu.matmul %194, %1, %cst_34 {dimension_numbers = #tpu.dot_dimension_numbers<[1], [0], [0], [1], [0, 0, 1, 1], [], []>} : vector<8x64xbf16>, vector<64x128xbf16>, vector<8x128xf32> -> vector<8x128xf32>
    %196 = vector.broadcast %3 : vector<1x128xf32> to vector<8x128xf32>
    %197 = arith.addf %195, %196 : vector<8x128xf32>
    %198 = arith.negf %197 : vector<8x128xf32>
    %199 = math.exp %198 : vector<8x128xf32>
    %cst_35 = arith.constant 1.000000e+00 : f32
    %200 = vector.broadcast %cst_35 : f32 to vector<8x128xf32>
    %201 = arith.addf %200, %199 : vector<8x128xf32>
    %202 = arith.divf %200, %201 : vector<8x128xf32>
    %203 = math.tanh %197 : vector<8x128xf32>
    %204 = vector.extract_strided_slice %202 {offsets = [0, 0], sizes = [8, 32], strides = [1, 1]} : vector<8x128xf32> to vector<8x32xf32>
    %205 = vector.extract_strided_slice %202 {offsets = [0, 32], sizes = [8, 32], strides = [1, 1]} : vector<8x128xf32> to vector<8x32xf32>
    %206 = vector.extract_strided_slice %202 {offsets = [0, 96], sizes = [8, 32], strides = [1, 1]} : vector<8x128xf32> to vector<8x32xf32>
    %207 = vector.extract_strided_slice %203 {offsets = [0, 64], sizes = [8, 32], strides = [1, 1]} : vector<8x128xf32> to vector<8x32xf32>
    %208 = arith.mulf %205, %169 : vector<8x32xf32>
    %209 = arith.mulf %204, %207 : vector<8x32xf32>
    %210 = arith.addf %208, %209 : vector<8x32xf32>
    %211 = math.tanh %210 : vector<8x32xf32>
    %212 = arith.mulf %206, %211 : vector<8x32xf32>
    %c0_36 = arith.constant 0 : index
    %c160 = arith.constant 160 : index
    %213 = vector.load %arg0[%c0_36, %c160] : memref<8x256xf32, #tpu.memory_space<vmem>>, vector<8x32xf32>
    %214 = tpu.concatenate %213, %192 in 1 : vector<8x32xf32>, vector<8x32xf32> -> vector<8x64xf32>
    %215 = arith.truncf %214 : vector<8x64xf32> to vector<8x64xbf16>
    %cst_37 = arith.constant dense<0.000000e+00> : vector<8x128xf32>
    %216 = tpu.matmul %215, %0, %cst_37 {dimension_numbers = #tpu.dot_dimension_numbers<[1], [0], [0], [1], [0, 0, 1, 1], [], []>} : vector<8x64xbf16>, vector<64x128xbf16>, vector<8x128xf32> -> vector<8x128xf32>
    %217 = vector.broadcast %2 : vector<1x128xf32> to vector<8x128xf32>
    %218 = arith.addf %216, %217 : vector<8x128xf32>
    %219 = arith.negf %218 : vector<8x128xf32>
    %220 = math.exp %219 : vector<8x128xf32>
    %cst_38 = arith.constant 1.000000e+00 : f32
    %221 = vector.broadcast %cst_38 : f32 to vector<8x128xf32>
    %222 = arith.addf %221, %220 : vector<8x128xf32>
    %223 = arith.divf %221, %222 : vector<8x128xf32>
    %224 = math.tanh %218 : vector<8x128xf32>
    %225 = vector.extract_strided_slice %223 {offsets = [0, 0], sizes = [8, 32], strides = [1, 1]} : vector<8x128xf32> to vector<8x32xf32>
    %226 = vector.extract_strided_slice %223 {offsets = [0, 32], sizes = [8, 32], strides = [1, 1]} : vector<8x128xf32> to vector<8x32xf32>
    %227 = vector.extract_strided_slice %223 {offsets = [0, 96], sizes = [8, 32], strides = [1, 1]} : vector<8x128xf32> to vector<8x32xf32>
    %228 = vector.extract_strided_slice %224 {offsets = [0, 64], sizes = [8, 32], strides = [1, 1]} : vector<8x128xf32> to vector<8x32xf32>
    %229 = arith.mulf %226, %190 : vector<8x32xf32>
    %230 = arith.mulf %225, %228 : vector<8x32xf32>
    %231 = arith.addf %229, %230 : vector<8x32xf32>
    %232 = math.tanh %231 : vector<8x32xf32>
    %233 = arith.mulf %227, %232 : vector<8x32xf32>
    %234 = tpu.concatenate %233, %212 in 1 : vector<8x32xf32>, vector<8x32xf32> -> vector<8x64xf32>
    %235 = arith.truncf %234 : vector<8x64xf32> to vector<8x64xbf16>
    %cst_39 = arith.constant dense<0.000000e+00> : vector<8x128xf32>
    %236 = tpu.matmul %235, %1, %cst_39 {dimension_numbers = #tpu.dot_dimension_numbers<[1], [0], [0], [1], [0, 0, 1, 1], [], []>} : vector<8x64xbf16>, vector<64x128xbf16>, vector<8x128xf32> -> vector<8x128xf32>
    %237 = vector.broadcast %3 : vector<1x128xf32> to vector<8x128xf32>
    %238 = arith.addf %236, %237 : vector<8x128xf32>
    %239 = arith.negf %238 : vector<8x128xf32>
    %240 = math.exp %239 : vector<8x128xf32>
    %cst_40 = arith.constant 1.000000e+00 : f32
    %241 = vector.broadcast %cst_40 : f32 to vector<8x128xf32>
    %242 = arith.addf %241, %240 : vector<8x128xf32>
    %243 = arith.divf %241, %242 : vector<8x128xf32>
    %244 = math.tanh %238 : vector<8x128xf32>
    %245 = vector.extract_strided_slice %243 {offsets = [0, 0], sizes = [8, 32], strides = [1, 1]} : vector<8x128xf32> to vector<8x32xf32>
    %246 = vector.extract_strided_slice %243 {offsets = [0, 32], sizes = [8, 32], strides = [1, 1]} : vector<8x128xf32> to vector<8x32xf32>
    %247 = vector.extract_strided_slice %243 {offsets = [0, 96], sizes = [8, 32], strides = [1, 1]} : vector<8x128xf32> to vector<8x32xf32>
    %248 = vector.extract_strided_slice %244 {offsets = [0, 64], sizes = [8, 32], strides = [1, 1]} : vector<8x128xf32> to vector<8x32xf32>
    %249 = arith.mulf %246, %210 : vector<8x32xf32>
    %250 = arith.mulf %245, %248 : vector<8x32xf32>
    %251 = arith.addf %249, %250 : vector<8x32xf32>
    %252 = math.tanh %251 : vector<8x32xf32>
    %253 = arith.mulf %247, %252 : vector<8x32xf32>
    %c0_41 = arith.constant 0 : index
    %c192 = arith.constant 192 : index
    %254 = vector.load %arg0[%c0_41, %c192] : memref<8x256xf32, #tpu.memory_space<vmem>>, vector<8x32xf32>
    %255 = tpu.concatenate %254, %233 in 1 : vector<8x32xf32>, vector<8x32xf32> -> vector<8x64xf32>
    %256 = arith.truncf %255 : vector<8x64xf32> to vector<8x64xbf16>
    %cst_42 = arith.constant dense<0.000000e+00> : vector<8x128xf32>
    %257 = tpu.matmul %256, %0, %cst_42 {dimension_numbers = #tpu.dot_dimension_numbers<[1], [0], [0], [1], [0, 0, 1, 1], [], []>} : vector<8x64xbf16>, vector<64x128xbf16>, vector<8x128xf32> -> vector<8x128xf32>
    %258 = vector.broadcast %2 : vector<1x128xf32> to vector<8x128xf32>
    %259 = arith.addf %257, %258 : vector<8x128xf32>
    %260 = arith.negf %259 : vector<8x128xf32>
    %261 = math.exp %260 : vector<8x128xf32>
    %cst_43 = arith.constant 1.000000e+00 : f32
    %262 = vector.broadcast %cst_43 : f32 to vector<8x128xf32>
    %263 = arith.addf %262, %261 : vector<8x128xf32>
    %264 = arith.divf %262, %263 : vector<8x128xf32>
    %265 = math.tanh %259 : vector<8x128xf32>
    %266 = vector.extract_strided_slice %264 {offsets = [0, 0], sizes = [8, 32], strides = [1, 1]} : vector<8x128xf32> to vector<8x32xf32>
    %267 = vector.extract_strided_slice %264 {offsets = [0, 32], sizes = [8, 32], strides = [1, 1]} : vector<8x128xf32> to vector<8x32xf32>
    %268 = vector.extract_strided_slice %264 {offsets = [0, 96], sizes = [8, 32], strides = [1, 1]} : vector<8x128xf32> to vector<8x32xf32>
    %269 = vector.extract_strided_slice %265 {offsets = [0, 64], sizes = [8, 32], strides = [1, 1]} : vector<8x128xf32> to vector<8x32xf32>
    %270 = arith.mulf %267, %231 : vector<8x32xf32>
    %271 = arith.mulf %266, %269 : vector<8x32xf32>
    %272 = arith.addf %270, %271 : vector<8x32xf32>
    %273 = math.tanh %272 : vector<8x32xf32>
    %274 = arith.mulf %268, %273 : vector<8x32xf32>
    %275 = tpu.concatenate %274, %253 in 1 : vector<8x32xf32>, vector<8x32xf32> -> vector<8x64xf32>
    %276 = arith.truncf %275 : vector<8x64xf32> to vector<8x64xbf16>
    %cst_44 = arith.constant dense<0.000000e+00> : vector<8x128xf32>
    %277 = tpu.matmul %276, %1, %cst_44 {dimension_numbers = #tpu.dot_dimension_numbers<[1], [0], [0], [1], [0, 0, 1, 1], [], []>} : vector<8x64xbf16>, vector<64x128xbf16>, vector<8x128xf32> -> vector<8x128xf32>
    %278 = vector.broadcast %3 : vector<1x128xf32> to vector<8x128xf32>
    %279 = arith.addf %277, %278 : vector<8x128xf32>
    %280 = arith.negf %279 : vector<8x128xf32>
    %281 = math.exp %280 : vector<8x128xf32>
    %cst_45 = arith.constant 1.000000e+00 : f32
    %282 = vector.broadcast %cst_45 : f32 to vector<8x128xf32>
    %283 = arith.addf %282, %281 : vector<8x128xf32>
    %284 = arith.divf %282, %283 : vector<8x128xf32>
    %285 = math.tanh %279 : vector<8x128xf32>
    %286 = vector.extract_strided_slice %284 {offsets = [0, 0], sizes = [8, 32], strides = [1, 1]} : vector<8x128xf32> to vector<8x32xf32>
    %287 = vector.extract_strided_slice %284 {offsets = [0, 32], sizes = [8, 32], strides = [1, 1]} : vector<8x128xf32> to vector<8x32xf32>
    %288 = vector.extract_strided_slice %284 {offsets = [0, 96], sizes = [8, 32], strides = [1, 1]} : vector<8x128xf32> to vector<8x32xf32>
    %289 = vector.extract_strided_slice %285 {offsets = [0, 64], sizes = [8, 32], strides = [1, 1]} : vector<8x128xf32> to vector<8x32xf32>
    %290 = arith.mulf %287, %251 : vector<8x32xf32>
    %291 = arith.mulf %286, %289 : vector<8x32xf32>
    %292 = arith.addf %290, %291 : vector<8x32xf32>
    %293 = math.tanh %292 : vector<8x32xf32>
    %294 = arith.mulf %288, %293 : vector<8x32xf32>
    %c0_46 = arith.constant 0 : index
    %c224 = arith.constant 224 : index
    %295 = vector.load %arg0[%c0_46, %c224] : memref<8x256xf32, #tpu.memory_space<vmem>>, vector<8x32xf32>
    %296 = tpu.concatenate %295, %274 in 1 : vector<8x32xf32>, vector<8x32xf32> -> vector<8x64xf32>
    %297 = arith.truncf %296 : vector<8x64xf32> to vector<8x64xbf16>
    %cst_47 = arith.constant dense<0.000000e+00> : vector<8x128xf32>
    %298 = tpu.matmul %297, %0, %cst_47 {dimension_numbers = #tpu.dot_dimension_numbers<[1], [0], [0], [1], [0, 0, 1, 1], [], []>} : vector<8x64xbf16>, vector<64x128xbf16>, vector<8x128xf32> -> vector<8x128xf32>
    %299 = vector.broadcast %2 : vector<1x128xf32> to vector<8x128xf32>
    %300 = arith.addf %298, %299 : vector<8x128xf32>
    %301 = arith.negf %300 : vector<8x128xf32>
    %302 = math.exp %301 : vector<8x128xf32>
    %cst_48 = arith.constant 1.000000e+00 : f32
    %303 = vector.broadcast %cst_48 : f32 to vector<8x128xf32>
    %304 = arith.addf %303, %302 : vector<8x128xf32>
    %305 = arith.divf %303, %304 : vector<8x128xf32>
    %306 = math.tanh %300 : vector<8x128xf32>
    %307 = vector.extract_strided_slice %305 {offsets = [0, 0], sizes = [8, 32], strides = [1, 1]} : vector<8x128xf32> to vector<8x32xf32>
    %308 = vector.extract_strided_slice %305 {offsets = [0, 32], sizes = [8, 32], strides = [1, 1]} : vector<8x128xf32> to vector<8x32xf32>
    %309 = vector.extract_strided_slice %305 {offsets = [0, 96], sizes = [8, 32], strides = [1, 1]} : vector<8x128xf32> to vector<8x32xf32>
    %310 = vector.extract_strided_slice %306 {offsets = [0, 64], sizes = [8, 32], strides = [1, 1]} : vector<8x128xf32> to vector<8x32xf32>
    %311 = arith.mulf %308, %272 : vector<8x32xf32>
    %312 = arith.mulf %307, %310 : vector<8x32xf32>
    %313 = arith.addf %311, %312 : vector<8x32xf32>
    %314 = math.tanh %313 : vector<8x32xf32>
    %315 = arith.mulf %309, %314 : vector<8x32xf32>
    %316 = tpu.concatenate %315, %294 in 1 : vector<8x32xf32>, vector<8x32xf32> -> vector<8x64xf32>
    %317 = arith.truncf %316 : vector<8x64xf32> to vector<8x64xbf16>
    %cst_49 = arith.constant dense<0.000000e+00> : vector<8x128xf32>
    %318 = tpu.matmul %317, %1, %cst_49 {dimension_numbers = #tpu.dot_dimension_numbers<[1], [0], [0], [1], [0, 0, 1, 1], [], []>} : vector<8x64xbf16>, vector<64x128xbf16>, vector<8x128xf32> -> vector<8x128xf32>
    %319 = vector.broadcast %3 : vector<1x128xf32> to vector<8x128xf32>
    %320 = arith.addf %318, %319 : vector<8x128xf32>
    %321 = arith.negf %320 : vector<8x128xf32>
    %322 = math.exp %321 : vector<8x128xf32>
    %cst_50 = arith.constant 1.000000e+00 : f32
    %323 = vector.broadcast %cst_50 : f32 to vector<8x128xf32>
    %324 = arith.addf %323, %322 : vector<8x128xf32>
    %325 = arith.divf %323, %324 : vector<8x128xf32>
    %326 = math.tanh %320 : vector<8x128xf32>
    %327 = vector.extract_strided_slice %325 {offsets = [0, 0], sizes = [8, 32], strides = [1, 1]} : vector<8x128xf32> to vector<8x32xf32>
    %328 = vector.extract_strided_slice %325 {offsets = [0, 32], sizes = [8, 32], strides = [1, 1]} : vector<8x128xf32> to vector<8x32xf32>
    %329 = vector.extract_strided_slice %325 {offsets = [0, 96], sizes = [8, 32], strides = [1, 1]} : vector<8x128xf32> to vector<8x32xf32>
    %330 = vector.extract_strided_slice %326 {offsets = [0, 64], sizes = [8, 32], strides = [1, 1]} : vector<8x128xf32> to vector<8x32xf32>
    %331 = arith.mulf %328, %292 : vector<8x32xf32>
    %332 = arith.mulf %327, %330 : vector<8x32xf32>
    %333 = arith.addf %331, %332 : vector<8x32xf32>
    %334 = math.tanh %333 : vector<8x32xf32>
    %335 = arith.mulf %329, %334 : vector<8x32xf32>
    %336 = tpu.concatenate %315, %335, %313, %333 in 1 : vector<8x32xf32>, vector<8x32xf32>, vector<8x32xf32>, vector<8x32xf32> -> vector<8x128xf32>
    %c0_51 = arith.constant 0 : index
    %c0_52 = arith.constant 0 : index
    %337 = vector.load %arg5[%c0_51, %c0_52] : memref<8x128xf32, #tpu.memory_space<vmem>>, vector<8x128xf32>
    tpu.vector_store %arg5[%c0_51, %c0_52], %336 {strides = array<i32>} : memref<8x128xf32, #tpu.memory_space<vmem>>, vector<8x128xf32>,
    return
  }
}

</mosaic_0001>

<llo_original>
// kernel: encoder_forward.1
$region0: #{encoder_forward.1}
  #allocation0 [shape = 'u32[]', space=smem, size = 0x4, offset = 0x4, fixed_abs, tag = 'smem constant byte address 0x4 - core index']
  #allocation1 [shape = 'u32[72,128]{1,0:T(1,128)}', space=vmem, size = 0x9000, scoped, tag = 'internal scratch']
  %s0 = inlined_call_operand.vmem [shape: f32[8,256], index: 0, kind: input, shape index: {}]
  %s1 = inlined_call_operand.vmem [shape: bf16[64,128], index: 1, kind: input, shape index: {}]
  %s2 = inlined_call_operand.vmem [shape: f32[1,128], index: 2, kind: input, shape index: {}]
  %s3 = inlined_call_operand.vmem [shape: bf16[64,128], index: 3, kind: input, shape index: {}]
  %s4 = inlined_call_operand.vmem [shape: f32[1,128], index: 4, kind: input, shape index: {}]
  %s5 = inlined_call_operand.vmem [shape: f32[8,128], index: 5, kind: output, shape index: {}]
  %s6 = sld [smem:[#allocation0]]
  $region30: #{encoder_forward.1} parent=0
    _
  %s8 = ssub.s32 1, %s6
  %s9 = scalar_select 0, %s8, %s6
  // Predicated region
  $region2: #{encoder_forward.1} parent=0 // pred_check
    _
  $region3: #{encoder_forward.1} parent=0 // pred_check_branch
    %11 = sbr.rel (0) target = $region5
  $region4: #{encoder_forward.1} parent=0 // pred_region
    _
  $region5: #{encoder_forward.1} parent=0 // pred_fallthru
    _
  // Predicated region
  $region6: #{encoder_forward.1} parent=0 // pred_check
    _
  $region7: #{encoder_forward.1} parent=0 // pred_check_branch
    %13 = sbr.rel (0) target = $region9
  $region8: #{encoder_forward.1} parent=0 // pred_region
    _
  $region9: #{encoder_forward.1} parent=0 // pred_fallthru
    _
  // Predicated region
  $region10: #{encoder_forward.1} parent=0 // pred_check
    _
  $region11: #{encoder_forward.1} parent=0 // pred_check_branch
    %15 = sbr.rel (0) target = $region13
  $region12: #{encoder_forward.1} parent=0 // pred_region
    _
  $region13: #{encoder_forward.1} parent=0 // pred_fallthru
    _
  // Predicated region
  $region14: #{encoder_forward.1} parent=0 // pred_check
    _
  $region15: #{encoder_forward.1} parent=0 // pred_check_branch
    %17 = sbr.rel (0) target = $region17
  $region16: #{encoder_forward.1} parent=0 // pred_region
    _
  $region17: #{encoder_forward.1} parent=0 // pred_fallthru
    _
  // Predicated region
  $region18: #{encoder_forward.1} parent=0 // pred_check
    _
  $region19: #{encoder_forward.1} parent=0 // pred_check_branch
    %19 = sbr.rel (0) target = $region21
  $region20: #{encoder_forward.1} parent=0 // pred_region
    _
  $region21: #{encoder_forward.1} parent=0 // pred_fallthru
    _
  %v21 = vld [vmem:[%s1] sm:$0xf]
  %v22 = vld [vmem:[%s1 + $0x4] sm:$0xf]
  %v23 = vld [vmem:[%s1 + $0x8] sm:$0xf]
  %v24 = vld [vmem:[%s1 + $0xc] sm:$0xf]
  %v25 = vld [vmem:[%s1 + $0x10] sm:$0xf]
  %v26 = vld [vmem:[%s1 + $0x14] sm:$0xf]
  %v27 = vld [vmem:[%s1 + $0x18] sm:$0xf]
  %v28 = vld [vmem:[%s1 + $0x1c] sm:$0xf]
  %v29 = vld [vmem:[%s3] sm:$0xf]
  %v30 = vld [vmem:[%s3 + $0x4] sm:$0xf]
  %v31 = vld [vmem:[%s3 + $0x8] sm:$0xf]
  %v32 = vld [vmem:[%s3 + $0xc] sm:$0xf]
  %v33 = vld [vmem:[%s3 + $0x10] sm:$0xf]
  %v34 = vld [vmem:[%s3 + $0x14] sm:$0xf]
  %v35 = vld [vmem:[%s3 + $0x18] sm:$0xf]
  %v36 = vld [vmem:[%s3 + $0x1c] sm:$0xf]
  %v37 = vld [vmem:[%s2] sm:$0x1]
  %v38 = vld [vmem:[%s4] sm:$0x1]
  %v39 = vld [vmem:[%s0] sm:$0xff]
  %vm40 = vcmask 261120
  %v41 = vsel %vm40, %v39, 0.0
  %v42 = vpack.c.bf16 %v41, %v41
  %v44 = vperm.slane %v37, 0
  %v54 = vunpack.c.l.b16 %v21
  %v55 = vunpack.c.l.b16 %v22
  %v56 = vunpack.c.l.b16 %v23
  %v57 = vunpack.c.l.b16 %v24
  %v58 = vunpack.c.l.b16 %v25
  %v59 = vunpack.c.l.b16 %v26
  %v60 = vunpack.c.l.b16 %v27
  %v61 = vunpack.c.l.b16 %v28
  %v62 = vpack.c.b16 %v55, %v54
  %v63 = vpack.c.b16 %v57, %v56
  %v64 = vpack.c.b16 %v59, %v58
  %v65 = vpack.c.b16 %v61, %v60
  %vm70 = vcmask 523264
  %v72 = vsel %vm70, %v42, 0
  %74 = vmatpush.bf16.msra.mxu0 0
  %75 = vmatpush.bf16.msra.mxu0 0
  %76 = vmatpush.bf16.msra.mxu0 0
  %77 = vmatpush.bf16.msra.mxu0 0
  %78 = vmatpush.bf16.msra.mxu0 %v65
  %79 = vmatpush.bf16.msra.mxu0 %v64
  %80 = vmatpush.bf16.msra.mxu0 %v63
  %81 = vmatpush.bf16.msra.mxu0 %v62
  %82 = vmatmul.bf16.gmra.mxu0 %v72
  %v83 = vpop.f32.mrf.mxu0
  %v84 = vadd.f32 %v44, %v83
  %v85 = vpop.f32.mrf.mxu0
  %86 = vdwg.mxu0
  %v87 = vxor.u32 %v84, 2147483648
  %v88 = vmul.f32 %v87, 1.442695
  %v89 = vpow.pop %v88
  %v90 = vadd.f32 %v89, 1.0
  %v91 = vrcp.pop %v90
  %v92 = vmul.f32 %v90, %v91
  %v93 = vsub.f32 1.0, %v92
  %v94 = vmul.f32 %v91, %v93
  %v95 = vadd.f32 %v91, %v94
  %vm96 = vweird.f32 %v90
  %vm97 = vweird.f32 %v91
  %vm98 = vmor %vm96, %vm97
  %v99 = vsel %vm98, %v91, %v95
  %v100 = vand.u32 2147483647, %v90
  %vm101 = vcmp.eq.f32.partialorder %v100, 8.507059e+37
  %v102 = vand.u32 %v90, 2147483648
  %v103 = vor.u32 1.1754944e-38, %v102
  %v104 = vsel %vm101, %v103, %v99
  %v105 = vmul.f32 1.0, %v104
  %v106 = vtanh.pop %v84
  %v107 = vmul.f32 %v105, 0.0
  %109 = vrot.lane.b32.xlu0 %v106, 64
  %v110 = vpop.permute.xlu0 %109
  %v112 = vmul.f32 %v105, %v110
  %114 = vrot.lane.b32.xlu0 %v112, 32
  %v115 = vpop.permute.xlu0 %114
  %v117 = vadd.f32 %v107, %v115
  %v118 = vtanh.pop %v117
  %120 = vrot.lane.b32.xlu0 %v118, 64
  %v121 = vpop.permute.xlu0 %120
  %v123 = vmul.f32 %v105, %v121
  %125 = vrot.lane.b32.xlu0 %v123, 32
  %v126 = vpop.permute.xlu0 %125
  %v128 = vsel %vm40, %v126, 0.0
  %v129 = vpack.c.bf16 %v128, %v128
  %v131 = vperm.slane %v38, 0
  %v141 = vunpack.c.l.b16 %v29
  %v142 = vunpack.c.l.b16 %v30
  %v143 = vunpack.c.l.b16 %v31
  %v144 = vunpack.c.l.b16 %v32
  %v145 = vunpack.c.l.b16 %v33
  %v146 = vunpack.c.l.b16 %v34
  %v147 = vunpack.c.l.b16 %v35
  %v148 = vunpack.c.l.b16 %v36
  %v149 = vpack.c.b16 %v142, %v141
  %v150 = vpack.c.b16 %v144, %v143
  %v151 = vpack.c.b16 %v146, %v145
  %v152 = vpack.c.b16 %v148, %v147
  %v158 = vsel %vm70, %v129, 0
  %160 = vmatpush.bf16.msra.mxu0 0
  %161 = vmatpush.bf16.msra.mxu0 0
  %162 = vmatpush.bf16.msra.mxu0 0
  %163 = vmatpush.bf16.msra.mxu0 0
  %164 = vmatpush.bf16.msra.mxu0 %v152
  %165 = vmatpush.bf16.msra.mxu0 %v151
  %166 = vmatpush.bf16.msra.mxu0 %v150
  %167 = vmatpush.bf16.msra.mxu0 %v149
  %168 = vmatmul.bf16.gmra.mxu0 %v158
  %v169 = vpop.f32.mrf.mxu0
  %v170 = vadd.f32 %v131, %v169
  %v171 = vpop.f32.mrf.mxu0
  %172 = vdwg.mxu0
  %v173 = vxor.u32 %v170, 2147483648
  %v174 = vmul.f32 %v173, 1.442695
  %v175 = vpow.pop %v174
  %v176 = vadd.f32 %v175, 1.0
  %v177 = vrcp.pop %v176
  %v178 = vmul.f32 %v176, %v177
  %v179 = vsub.f32 1.0, %v178
  %v180 = vmul.f32 %v177, %v179
  %v181 = vadd.f32 %v177, %v180
  %vm182 = vweird.f32 %v176
  %vm183 = vweird.f32 %v177
  %vm184 = vmor %vm182, %vm183
  %v185 = vsel %vm184, %v177, %v181
  %v186 = vand.u32 2147483647, %v176
  %vm187 = vcmp.eq.f32.partialorder %v186, 8.507059e+37
  %v188 = vand.u32 %v176, 2147483648
  %v189 = vor.u32 1.1754944e-38, %v188
  %v190 = vsel %vm187, %v189, %v185
  %v191 = vmul.f32 1.0, %v190
  %v192 = vtanh.pop %v170
  %v193 = vmul.f32 %v191, 0.0
  %195 = vrot.lane.b32.xlu0 %v192, 64
  %v196 = vpop.permute.xlu0 %195
  %v198 = vmul.f32 %v191, %v196
  %200 = vrot.lane.b32.xlu0 %v198, 32
  %v201 = vpop.permute.xlu0 %200
  %v203 = vadd.f32 %v193, %v201
  %v204 = vtanh.pop %v203
  %206 = vrot.lane.b32.xlu0 %v204, 64
  %v207 = vpop.permute.xlu0 %206
  %v209 = vmul.f32 %v191, %v207
  %211 = vrot.lane.b32.xlu0 %v39, 96
  %v212 = vpop.permute.xlu0 %211
  %214 = vrot.lane.b32.xlu0 %v123, 64
  %v215 = vpop.permute.xlu0 %214
  %v217 = vsel %vm40, %v212, %v215
  %v218 = vpack.c.bf16 %v217, %v217
  %v220 = vsel %vm70, %v218, 0
  %222 = vmatpush.bf16.msra.mxu0 0
  %223 = vmatpush.bf16.msra.mxu0 0
  %224 = vmatpush.bf16.msra.mxu0 0
  %225 = vmatpush.bf16.msra.mxu0 0
  %226 = vmatpush.bf16.msra.mxu0 %v65
  %227 = vmatpush.bf16.msra.mxu0 %v64
  %228 = vmatpush.bf16.msra.mxu0 %v63
  %229 = vmatpush.bf16.msra.mxu0 %v62
  %230 = vmatmul.bf16.gmra.mxu0 %v220
  %v231 = vpop.f32.mrf.mxu0
  %v232 = vadd.f32 %v44, %v231
  %v233 = vpop.f32.mrf.mxu0
  %234 = vdwg.mxu0
  %v235 = vxor.u32 %v232, 2147483648
  %v236 = vmul.f32 %v235, 1.442695
  %v237 = vpow.pop %v236
  %v238 = vadd.f32 %v237, 1.0
  %v239 = vrcp.pop %v238
  %v240 = vmul.f32 %v238, %v239
  %v241 = vsub.f32 1.0, %v240
  %v242 = vmul.f32 %v239, %v241
  %v243 = vadd.f32 %v239, %v242
  %vm244 = vweird.f32 %v238
  %vm245 = vweird.f32 %v239
  %vm246 = vmor %vm244, %vm245
  %v247 = vsel %vm246, %v239, %v243
  %v248 = vand.u32 2147483647, %v238
  %vm249 = vcmp.eq.f32.partialorder %v248, 8.507059e+37
  %v250 = vand.u32 %v238, 2147483648
  %v251 = vor.u32 1.1754944e-38, %v250
  %v252 = vsel %vm249, %v251, %v247
  %v253 = vmul.f32 1.0, %v252
  %v254 = vtanh.pop %v232
  %v255 = vmul.f32 %v253, %v117
  %257 = vrot.lane.b32.xlu0 %v254, 64
  %v258 = vpop.permute.xlu0 %257
  %v260 = vmul.f32 %v253, %v258
  %262 = vrot.lane.b32.xlu0 %v260, 32
  %v263 = vpop.permute.xlu0 %262
  %v265 = vadd.f32 %v255, %v263
  %v266 = vtanh.pop %v265
  %268 = vrot.lane.b32.xlu0 %v266, 64
  %v269 = vpop.permute.xlu0 %268
  %v271 = vmul.f32 %v253, %v269
  %273 = vrot.lane.b32.xlu0 %v271, 32
  %v274 = vpop.permute.xlu0 %273
  %277 = vrot.lane.b32.xlu0 %v209, 64
  %v278 = vpop.permute.xlu0 %277
  %v280 = vsel %vm40, %v274, %v278
  %v281 = vpack.c.bf16 %v280, %v280
  %v283 = vsel %vm70, %v281, 0
  %285 = vmatpush.bf16.msra.mxu0 0
  %286 = vmatpush.bf16.msra.mxu0 0
  %287 = vmatpush.bf16.msra.mxu0 0
  %288 = vmatpush.bf16.msra.mxu0 0
  %289 = vmatpush.bf16.msra.mxu0 %v152
  %290 = vmatpush.bf16.msra.mxu0 %v151
  %291 = vmatpush.bf16.msra.mxu0 %v150
  %292 = vmatpush.bf16.msra.mxu0 %v149
  %293 = vmatmul.bf16.gmra.mxu0 %v283
  %v294 = vpop.f32.mrf.mxu0
  %v295 = vadd.f32 %v131, %v294
  %v296 = vpop.f32.mrf.mxu0
  %297 = vdwg.mxu0
  %v298 = vxor.u32 %v295, 2147483648
  %v299 = vmul.f32 %v298, 1.442695
  %v300 = vpow.pop %v299
  %v301 = vadd.f32 %v300, 1.0
  %v302 = vrcp.pop %v301
  %v303 = vmul.f32 %v301, %v302
  %v304 = vsub.f32 1.0, %v303
  %v305 = vmul.f32 %v302, %v304
  %v306 = vadd.f32 %v302, %v305
  %vm307 = vweird.f32 %v301
  %vm308 = vweird.f32 %v302
  %vm309 = vmor %vm307, %vm308
  %v310 = vsel %vm309, %v302, %v306
  %v311 = vand.u32 2147483647, %v301
  %vm312 = vcmp.eq.f32.partialorder %v311, 8.507059e+37
  %v313 = vand.u32 %v301, 2147483648
  %v314 = vor.u32 1.1754944e-38, %v313
  %v315 = vsel %vm312, %v314, %v310
  %v316 = vmul.f32 1.0, %v315
  %v317 = vtanh.pop %v295
  %v318 = vmul.f32 %v316, %v203
  %320 = vrot.lane.b32.xlu0 %v317, 64
  %v321 = vpop.permute.xlu0 %320
  %v323 = vmul.f32 %v316, %v321
  %325 = vrot.lane.b32.xlu0 %v323, 32
  %v326 = vpop.permute.xlu0 %325
  %v328 = vadd.f32 %v318, %v326
  %v329 = vtanh.pop %v328
  %331 = vrot.lane.b32.xlu0 %v329, 64
  %v332 = vpop.permute.xlu0 %331
  %v334 = vmul.f32 %v316, %v332
  %335 = vrot.lane.b32.xlu0 %v39, 64
  %v336 = vpop.permute.xlu0 %335
  %338 = vrot.lane.b32.xlu0 %v271, 64
  %v339 = vpop.permute.xlu0 %338
  %v341 = vsel %vm40, %v336, %v339
  %v342 = vpack.c.bf16 %v341, %v341
  %v344 = vsel %vm70, %v342, 0
  %346 = vmatpush.bf16.msra.mxu0 0
  %347 = vmatpush.bf16.msra.mxu0 0
  %348 = vmatpush.bf16.msra.mxu0 0
  %349 = vmatpush.bf16.msra.mxu0 0
  %350 = vmatpush.bf16.msra.mxu0 %v65
  %351 = vmatpush.bf16.msra.mxu0 %v64
  %352 = vmatpush.bf16.msra.mxu0 %v63
  %353 = vmatpush.bf16.msra.mxu0 %v62
  %354 = vmatmul.bf16.gmra.mxu0 %v344
  %v355 = vpop.f32.mrf.mxu0
  %v356 = vadd.f32 %v44, %v355
  %v357 = vpop.f32.mrf.mxu0
  %358 = vdwg.mxu0
  %v359 = vxor.u32 %v356, 2147483648
  %v360 = vmul.f32 %v359, 1.442695
  %v361 = vpow.pop %v360
  %v362 = vadd.f32 %v361, 1.0
  %v363 = vrcp.pop %v362
  %v364 = vmul.f32 %v362, %v363
  %v365 = vsub.f32 1.0, %v364
  %v366 = vmul.f32 %v363, %v365
  %v367 = vadd.f32 %v363, %v366
  %vm368 = vweird.f32 %v362
  %vm369 = vweird.f32 %v363
  %vm370 = vmor %vm368, %vm369
  %v371 = vsel %vm370, %v363, %v367
  %v372 = vand.u32 2147483647, %v362
  %vm373 = vcmp.eq.f32.partialorder %v372, 8.507059e+37
  %v374 = vand.u32 %v362, 2147483648
  %v375 = vor.u32 1.1754944e-38, %v374
  %v376 = vsel %vm373, %v375, %v371
  %v377 = vmul.f32 1.0, %v376
  %v378 = vtanh.pop %v356
  %v379 = vmul.f32 %v377, %v265
  %381 = vrot.lane.b32.xlu0 %v378, 64
  %v382 = vpop.permute.xlu0 %381
  %v384 = vmul.f32 %v377, %v382
  %386 = vrot.lane.b32.xlu0 %v384, 32
  %v387 = vpop.permute.xlu0 %386
  %v389 = vadd.f32 %v379, %v387
  %v390 = vtanh.pop %v389
  %392 = vrot.lane.b32.xlu0 %v390, 64
  %v393 = vpop.permute.xlu0 %392
  %v395 = vmul.f32 %v377, %v393
  %397 = vrot.lane.b32.xlu0 %v395, 32
  %v398 = vpop.permute.xlu0 %397
  %401 = vrot.lane.b32.xlu0 %v334, 64
  %v402 = vpop.permute.xlu0 %401
  %v404 = vsel %vm40, %v398, %v402
  %v405 = vpack.c.bf16 %v404, %v404
  %v407 = vsel %vm70, %v405, 0
  %409 = vmatpush.bf16.msra.mxu0 0
  %410 = vmatpush.bf16.msra.mxu0 0
  %411 = vmatpush.bf16.msra.mxu0 0
  %412 = vmatpush.bf16.msra.mxu0 0
  %413 = vmatpush.bf16.msra.mxu0 %v152
  %414 = vmatpush.bf16.msra.mxu0 %v151
  %415 = vmatpush.bf16.msra.mxu0 %v150
  %416 = vmatpush.bf16.msra.mxu0 %v149
  %417 = vmatmul.bf16.gmra.mxu0 %v407
  %v418 = vpop.f32.mrf.mxu0
  %v419 = vadd.f32 %v131, %v418
  %v420 = vpop.f32.mrf.mxu0
  %421 = vdwg.mxu0
  %v422 = vxor.u32 %v419, 2147483648
  %v423 = vmul.f32 %v422, 1.442695
  %v424 = vpow.pop %v423
  %v425 = vadd.f32 %v424, 1.0
  %v426 = vrcp.pop %v425
  %v427 = vmul.f32 %v425, %v426
  %v428 = vsub.f32 1.0, %v427
  %v429 = vmul.f32 %v426, %v428
  %v430 = vadd.f32 %v426, %v429
  %vm431 = vweird.f32 %v425
  %vm432 = vweird.f32 %v426
  %vm433 = vmor %vm431, %vm432
  %v434 = vsel %vm433, %v426, %v430
  %v435 = vand.u32 2147483647, %v425
  %vm436 = vcmp.eq.f32.partialorder %v435, 8.507059e+37
  %v437 = vand.u32 %v425, 2147483648
  %v438 = vor.u32 1.1754944e-38, %v437
  %v439 = vsel %vm436, %v438, %v434
  %v440 = vmul.f32 1.0, %v439
  %v441 = vtanh.pop %v419
  %v442 = vmul.f32 %v440, %v328
  %444 = vrot.lane.b32.xlu0 %v441, 64
  %v445 = vpop.permute.xlu0 %444
  %v447 = vmul.f32 %v440, %v445
  %449 = vrot.lane.b32.xlu0 %v447, 32
  %v450 = vpop.permute.xlu0 %449
  %v452 = vadd.f32 %v442, %v450
  %v453 = vtanh.pop %v452
  %455 = vrot.lane.b32.xlu0 %v453, 64
  %v456 = vpop.permute.xlu0 %455
  %v458 = vmul.f32 %v440, %v456
  %459 = vrot.lane.b32.xlu0 %v39, 32
  %v460 = vpop.permute.xlu0 %459
  %462 = vrot.lane.b32.xlu0 %v395, 64
  %v463 = vpop.permute.xlu0 %462
  %v465 = vsel %vm40, %v460, %v463
  %v466 = vpack.c.bf16 %v465, %v465
  %v468 = vsel %vm70, %v466, 0
  %470 = vmatpush.bf16.msra.mxu0 0
  %471 = vmatpush.bf16.msra.mxu0 0
  %472 = vmatpush.bf16.msra.mxu0 0
  %473 = vmatpush.bf16.msra.mxu0 0
  %474 = vmatpush.bf16.msra.mxu0 %v65
  %475 = vmatpush.bf16.msra.mxu0 %v64
  %476 = vmatpush.bf16.msra.mxu0 %v63
  %477 = vmatpush.bf16.msra.mxu0 %v62
  %478 = vmatmul.bf16.gmra.mxu0 %v468
  %v479 = vpop.f32.mrf.mxu0
  %v480 = vadd.f32 %v44, %v479
  %v481 = vpop.f32.mrf.mxu0
  %482 = vdwg.mxu0
  %v483 = vxor.u32 %v480, 2147483648
  %v484 = vmul.f32 %v483, 1.442695
  %v485 = vpow.pop %v484
  %v486 = vadd.f32 %v485, 1.0
  %v487 = vrcp.pop %v486
  %v488 = vmul.f32 %v486, %v487
  %v489 = vsub.f32 1.0, %v488
  %v490 = vmul.f32 %v487, %v489
  %v491 = vadd.f32 %v487, %v490
  %vm492 = vweird.f32 %v486
  %vm493 = vweird.f32 %v487
  %vm494 = vmor %vm492, %vm493
  %v495 = vsel %vm494, %v487, %v491
  %v496 = vand.u32 2147483647, %v486
  %vm497 = vcmp.eq.f32.partialorder %v496, 8.507059e+37
  %v498 = vand.u32 %v486, 2147483648
  %v499 = vor.u32 1.1754944e-38, %v498
  %v500 = vsel %vm497, %v499, %v495
  %v501 = vmul.f32 1.0, %v500
  %v502 = vtanh.pop %v480
  %v503 = vmul.f32 %v501, %v389
  %505 = vrot.lane.b32.xlu0 %v502, 64
  %v506 = vpop.permute.xlu0 %505
  %v508 = vmul.f32 %v501, %v506
  %510 = vrot.lane.b32.xlu0 %v508, 32
  %v511 = vpop.permute.xlu0 %510
  %v513 = vadd.f32 %v503, %v511
  %v514 = vtanh.pop %v513
  %516 = vrot.lane.b32.xlu0 %v514, 64
  %v517 = vpop.permute.xlu0 %516
  %v519 = vmul.f32 %v501, %v517
  %521 = vrot.lane.b32.xlu0 %v519, 32
  %v522 = vpop.permute.xlu0 %521
  %525 = vrot.lane.b32.xlu0 %v458, 64
  %v526 = vpop.permute.xlu0 %525
  %v528 = vsel %vm40, %v522, %v526
  %v529 = vpack.c.bf16 %v528, %v528
  %v531 = vsel %vm70, %v529, 0
  %533 = vmatpush.bf16.msra.mxu0 0
  %534 = vmatpush.bf16.msra.mxu0 0
  %535 = vmatpush.bf16.msra.mxu0 0
  %536 = vmatpush.bf16.msra.mxu0 0
  %537 = vmatpush.bf16.msra.mxu0 %v152
  %538 = vmatpush.bf16.msra.mxu0 %v151
  %539 = vmatpush.bf16.msra.mxu0 %v150
  %540 = vmatpush.bf16.msra.mxu0 %v149
  %541 = vmatmul.bf16.gmra.mxu0 %v531
  %v542 = vpop.f32.mrf.mxu0
  %v543 = vadd.f32 %v131, %v542
  %v544 = vpop.f32.mrf.mxu0
  %545 = vdwg.mxu0
  %v546 = vxor.u32 %v543, 2147483648
  %v547 = vmul.f32 %v546, 1.442695
  %v548 = vpow.pop %v547
  %v549 = vadd.f32 %v548, 1.0
  %v550 = vrcp.pop %v549
  %v551 = vmul.f32 %v549, %v550
  %v552 = vsub.f32 1.0, %v551
  %v553 = vmul.f32 %v550, %v552
  %v554 = vadd.f32 %v550, %v553
  %vm555 = vweird.f32 %v549
  %vm556 = vweird.f32 %v550
  %vm557 = vmor %vm555, %vm556
  %v558 = vsel %vm557, %v550, %v554
  %v559 = vand.u32 2147483647, %v549
  %vm560 = vcmp.eq.f32.partialorder %v559, 8.507059e+37
  %v561 = vand.u32 %v549, 2147483648
  %v562 = vor.u32 1.1754944e-38, %v561
  %v563 = vsel %vm560, %v562, %v558
  %v564 = vmul.f32 1.0, %v563
  %v565 = vtanh.pop %v543
  %v566 = vmul.f32 %v564, %v452
  %568 = vrot.lane.b32.xlu0 %v565, 64
  %v569 = vpop.permute.xlu0 %568
  %v571 = vmul.f32 %v564, %v569
  %573 = vrot.lane.b32.xlu0 %v571, 32
  %v574 = vpop.permute.xlu0 %573
  %v576 = vadd.f32 %v566, %v574
  %v577 = vtanh.pop %v576
  %579 = vrot.lane.b32.xlu0 %v577, 64
  %v580 = vpop.permute.xlu0 %579
  %v582 = vmul.f32 %v564, %v580
  %v583 = vld [vmem:[%s0 + $0x8] sm:$0xff]
  %584 = vrot.lane.b32.xlu0 %v519, 64
  %v585 = vpop.permute.xlu0 %584
  %v587 = vsel %vm40, %v583, %v585
  %v588 = vpack.c.bf16 %v587, %v587
  %v590 = vsel %vm70, %v588, 0
  %592 = vmatpush.bf16.msra.mxu0 0
  %593 = vmatpush.bf16.msra.mxu0 0
  %594 = vmatpush.bf16.msra.mxu0 0
  %595 = vmatpush.bf16.msra.mxu0 0
  %596 = vmatpush.bf16.msra.mxu0 %v65
  %597 = vmatpush.bf16.msra.mxu0 %v64
  %598 = vmatpush.bf16.msra.mxu0 %v63
  %599 = vmatpush.bf16.msra.mxu0 %v62
  %600 = vmatmul.bf16.gmra.mxu0 %v590
  %v601 = vpop.f32.mrf.mxu0
  %v602 = vadd.f32 %v44, %v601
  %v603 = vpop.f32.mrf.mxu0
  %604 = vdwg.mxu0
  %v605 = vxor.u32 %v602, 2147483648
  %v606 = vmul.f32 %v605, 1.442695
  %v607 = vpow.pop %v606
  %v608 = vadd.f32 %v607, 1.0
  %v609 = vrcp.pop %v608
  %v610 = vmul.f32 %v608, %v609
  %v611 = vsub.f32 1.0, %v610
  %v612 = vmul.f32 %v609, %v611
  %v613 = vadd.f32 %v609, %v612
  %vm614 = vweird.f32 %v608
  %vm615 = vweird.f32 %v609
  %vm616 = vmor %vm614, %vm615
  %v617 = vsel %vm616, %v609, %v613
  %v618 = vand.u32 2147483647, %v608
  %vm619 = vcmp.eq.f32.partialorder %v618, 8.507059e+37
  %v620 = vand.u32 %v608, 2147483648
  %v621 = vor.u32 1.1754944e-38, %v620
  %v622 = vsel %vm619, %v621, %v617
  %v623 = vmul.f32 1.0, %v622
  %v624 = vtanh.pop %v602
  %v625 = vmul.f32 %v623, %v513
  %627 = vrot.lane.b32.xlu0 %v624, 64
  %v628 = vpop.permute.xlu0 %627
  %v630 = vmul.f32 %v623, %v628
  %632 = vrot.lane.b32.xlu0 %v630, 32
  %v633 = vpop.permute.xlu0 %632
  %v635 = vadd.f32 %v625, %v633
  %v636 = vtanh.pop %v635
  %638 = vrot.lane.b32.xlu0 %v636, 64
  %v639 = vpop.permute.xlu0 %638
  %v641 = vmul.f32 %v623, %v639
  %643 = vrot.lane.b32.xlu0 %v641, 32
  %v644 = vpop.permute.xlu0 %643
  %647 = vrot.lane.b32.xlu0 %v582, 64
  %v648 = vpop.permute.xlu0 %647
  %v650 = vsel %vm40, %v644, %v648
  %v651 = vpack.c.bf16 %v650, %v650
  %v653 = vsel %vm70, %v651, 0
  %655 = vmatpush.bf16.msra.mxu0 0
  %656 = vmatpush.bf16.msra.mxu0 0
  %657 = vmatpush.bf16.msra.mxu0 0
  %658 = vmatpush.bf16.msra.mxu0 0
  %659 = vmatpush.bf16.msra.mxu0 %v152
  %660 = vmatpush.bf16.msra.mxu0 %v151
  %661 = vmatpush.bf16.msra.mxu0 %v150
  %662 = vmatpush.bf16.msra.mxu0 %v149
  %663 = vmatmul.bf16.gmra.mxu0 %v653
  %v664 = vpop.f32.mrf.mxu0
  %v665 = vadd.f32 %v131, %v664
  %v666 = vpop.f32.mrf.mxu0
  %667 = vdwg.mxu0
  %v668 = vxor.u32 %v665, 2147483648
  %v669 = vmul.f32 %v668, 1.442695
  %v670 = vpow.pop %v669
  %v671 = vadd.f32 %v670, 1.0
  %v672 = vrcp.pop %v671
  %v673 = vmul.f32 %v671, %v672
  %v674 = vsub.f32 1.0, %v673
  %v675 = vmul.f32 %v672, %v674
  %v676 = vadd.f32 %v672, %v675
  %vm677 = vweird.f32 %v671
  %vm678 = vweird.f32 %v672
  %vm679 = vmor %vm677, %vm678
  %v680 = vsel %vm679, %v672, %v676
  %v681 = vand.u32 2147483647, %v671
  %vm682 = vcmp.eq.f32.partialorder %v681, 8.507059e+37
  %v683 = vand.u32 %v671, 2147483648
  %v684 = vor.u32 1.1754944e-38, %v683
  %v685 = vsel %vm682, %v684, %v680
  %v686 = vmul.f32 1.0, %v685
  %v687 = vtanh.pop %v665
  %v688 = vmul.f32 %v686, %v576
  %690 = vrot.lane.b32.xlu0 %v687, 64
  %v691 = vpop.permute.xlu0 %690
  %v693 = vmul.f32 %v686, %v691
  %695 = vrot.lane.b32.xlu0 %v693, 32
  %v696 = vpop.permute.xlu0 %695
  %v698 = vadd.f32 %v688, %v696
  %v699 = vtanh.pop %v698
  %701 = vrot.lane.b32.xlu0 %v699, 64
  %v702 = vpop.permute.xlu0 %701
  %v704 = vmul.f32 %v686, %v702
  %706 = vrot.lane.b32.xlu0 %v583, 96
  %v707 = vpop.permute.xlu0 %706
  %709 = vrot.lane.b32.xlu0 %v641, 64
  %v710 = vpop.permute.xlu0 %709
  %v712 = vsel %vm40, %v707, %v710
  %v713 = vpack.c.bf16 %v712, %v712
  %v715 = vsel %vm70, %v713, 0
  %717 = vmatpush.bf16.msra.mxu0 0
  %718 = vmatpush.bf16.msra.mxu0 0
  %719 = vmatpush.bf16.msra.mxu0 0
  %720 = vmatpush.bf16.msra.mxu0 0
  %721 = vmatpush.bf16.msra.mxu0 %v65
  %722 = vmatpush.bf16.msra.mxu0 %v64
  %723 = vmatpush.bf16.msra.mxu0 %v63
  %724 = vmatpush.bf16.msra.mxu0 %v62
  %725 = vmatmul.bf16.gmra.mxu0 %v715
  %v726 = vpop.f32.mrf.mxu0
  %v727 = vadd.f32 %v44, %v726
  %v728 = vpop.f32.mrf.mxu0
  %729 = vdwg.mxu0
  %v730 = vxor.u32 %v727, 2147483648
  %v731 = vmul.f32 %v730, 1.442695
  %v732 = vpow.pop %v731
  %v733 = vadd.f32 %v732, 1.0
  %v734 = vrcp.pop %v733
  %v735 = vmul.f32 %v733, %v734
  %v736 = vsub.f32 1.0, %v735
  %v737 = vmul.f32 %v734, %v736
  %v738 = vadd.f32 %v734, %v737
  %vm739 = vweird.f32 %v733
  %vm740 = vweird.f32 %v734
  %vm741 = vmor %vm739, %vm740
  %v742 = vsel %vm741, %v734, %v738
  %v743 = vand.u32 2147483647, %v733
  %vm744 = vcmp.eq.f32.partialorder %v743, 8.507059e+37
  %v745 = vand.u32 %v733, 2147483648
  %v746 = vor.u32 1.1754944e-38, %v745
  %v747 = vsel %vm744, %v746, %v742
  %v748 = vmul.f32 1.0, %v747
  %v749 = vtanh.pop %v727
  %v750 = vmul.f32 %v748, %v635
  %752 = vrot.lane.b32.xlu0 %v749, 64
  %v753 = vpop.permute.xlu0 %752
  %v755 = vmul.f32 %v748, %v753
  %757 = vrot.lane.b32.xlu0 %v755, 32
  %v758 = vpop.permute.xlu0 %757
  %v760 = vadd.f32 %v750, %v758
  %v761 = vtanh.pop %v760
  %763 = vrot.lane.b32.xlu0 %v761, 64
  %v764 = vpop.permute.xlu0 %763
  %v766 = vmul.f32 %v748, %v764
  %768 = vrot.lane.b32.xlu0 %v766, 32
  %v769 = vpop.permute.xlu0 %768
  %772 = vrot.lane.b32.xlu0 %v704, 64
  %v773 = vpop.permute.xlu0 %772
  %v775 = vsel %vm40, %v769, %v773
  %v776 = vpack.c.bf16 %v775, %v775
  %v778 = vsel %vm70, %v776, 0
  %780 = vmatpush.bf16.msra.mxu0 0
  %781 = vmatpush.bf16.msra.mxu0 0
  %782 = vmatpush.bf16.msra.mxu0 0
  %783 = vmatpush.bf16.msra.mxu0 0
  %784 = vmatpush.bf16.msra.mxu0 %v152
  %785 = vmatpush.bf16.msra.mxu0 %v151
  %786 = vmatpush.bf16.msra.mxu0 %v150
  %787 = vmatpush.bf16.msra.mxu0 %v149
  %788 = vmatmul.bf16.gmra.mxu0 %v778
  %v789 = vpop.f32.mrf.mxu0
  %v790 = vadd.f32 %v131, %v789
  %v791 = vpop.f32.mrf.mxu0
  %792 = vdwg.mxu0
  %v793 = vxor.u32 %v790, 2147483648
  %v794 = vmul.f32 %v793, 1.442695
  %v795 = vpow.pop %v794
  %v796 = vadd.f32 %v795, 1.0
  %v797 = vrcp.pop %v796
  %v798 = vmul.f32 %v796, %v797
  %v799 = vsub.f32 1.0, %v798
  %v800 = vmul.f32 %v797, %v799
  %v801 = vadd.f32 %v797, %v800
  %vm802 = vweird.f32 %v796
  %vm803 = vweird.f32 %v797
  %vm804 = vmor %vm802, %vm803
  %v805 = vsel %vm804, %v797, %v801
  %v806 = vand.u32 2147483647, %v796
  %vm807 = vcmp.eq.f32.partialorder %v806, 8.507059e+37
  %v808 = vand.u32 %v796, 2147483648
  %v809 = vor.u32 1.1754944e-38, %v808
  %v810 = vsel %vm807, %v809, %v805
  %v811 = vmul.f32 1.0, %v810
  %v812 = vtanh.pop %v790
  %v813 = vmul.f32 %v811, %v698
  %815 = vrot.lane.b32.xlu0 %v812, 64
  %v816 = vpop.permute.xlu0 %815
  %v818 = vmul.f32 %v811, %v816
  %820 = vrot.lane.b32.xlu0 %v818, 32
  %v821 = vpop.permute.xlu0 %820
  %v823 = vadd.f32 %v813, %v821
  %v824 = vtanh.pop %v823
  %826 = vrot.lane.b32.xlu0 %v824, 64
  %v827 = vpop.permute.xlu0 %826
  %v829 = vmul.f32 %v811, %v827
  %830 = vrot.lane.b32.xlu0 %v583, 64
  %v831 = vpop.permute.xlu0 %830
  %833 = vrot.lane.b32.xlu0 %v766, 64
  %v834 = vpop.permute.xlu0 %833
  %v836 = vsel %vm40, %v831, %v834
  %v837 = vpack.c.bf16 %v836, %v836
  %v839 = vsel %vm70, %v837, 0
  %841 = vmatpush.bf16.msra.mxu0 0
  %842 = vmatpush.bf16.msra.mxu0 0
  %843 = vmatpush.bf16.msra.mxu0 0
  %844 = vmatpush.bf16.msra.mxu0 0
  %845 = vmatpush.bf16.msra.mxu0 %v65
  %846 = vmatpush.bf16.msra.mxu0 %v64
  %847 = vmatpush.bf16.msra.mxu0 %v63
  %848 = vmatpush.bf16.msra.mxu0 %v62
  %849 = vmatmul.bf16.gmra.mxu0 %v839
  %v850 = vpop.f32.mrf.mxu0
  %v851 = vadd.f32 %v44, %v850
  %v852 = vpop.f32.mrf.mxu0
  %853 = vdwg.mxu0
  %v854 = vxor.u32 %v851, 2147483648
  %v855 = vmul.f32 %v854, 1.442695
  %v856 = vpow.pop %v855
  %v857 = vadd.f32 %v856, 1.0
  %v858 = vrcp.pop %v857
  %v859 = vmul.f32 %v857, %v858
  %v860 = vsub.f32 1.0, %v859
  %v861 = vmul.f32 %v858, %v860
  %v862 = vadd.f32 %v858, %v861
  %vm863 = vweird.f32 %v857
  %vm864 = vweird.f32 %v858
  %vm865 = vmor %vm863, %vm864
  %v866 = vsel %vm865, %v858, %v862
  %v867 = vand.u32 2147483647, %v857
  %vm868 = vcmp.eq.f32.partialorder %v867, 8.507059e+37
  %v869 = vand.u32 %v857, 2147483648
  %v870 = vor.u32 1.1754944e-38, %v869
  %v871 = vsel %vm868, %v870, %v866
  %v872 = vmul.f32 1.0, %v871
  %v873 = vtanh.pop %v851
  %v874 = vmul.f32 %v872, %v760
  %876 = vrot.lane.b32.xlu0 %v873, 64
  %v877 = vpop.permute.xlu0 %876
  %v879 = vmul.f32 %v872, %v877
  %881 = vrot.lane.b32.xlu0 %v879, 32
  %v882 = vpop.permute.xlu0 %881
  %v884 = vadd.f32 %v874, %v882
  %v885 = vtanh.pop %v884
  %887 = vrot.lane.b32.xlu0 %v885, 64
  %v888 = vpop.permute.xlu0 %887
  %v890 = vmul.f32 %v872, %v888
  %892 = vrot.lane.b32.xlu0 %v890, 32
  %v893 = vpop.permute.xlu0 %892
  %896 = vrot.lane.b32.xlu0 %v829, 64
  %v897 = vpop.permute.xlu0 %896
  %v899 = vsel %vm40, %v893, %v897
  %v900 = vpack.c.bf16 %v899, %v899
  %v902 = vsel %vm70, %v900, 0
  %904 = vmatpush.bf16.msra.mxu0 0
  %905 = vmatpush.bf16.msra.mxu0 0
  %906 = vmatpush.bf16.msra.mxu0 0
  %907 = vmatpush.bf16.msra.mxu0 0
  %908 = vmatpush.bf16.msra.mxu0 %v152
  %909 = vmatpush.bf16.msra.mxu0 %v151
  %910 = vmatpush.bf16.msra.mxu0 %v150
  %911 = vmatpush.bf16.msra.mxu0 %v149
  %912 = vmatmul.bf16.gmra.mxu0 %v902
  %v913 = vpop.f32.mrf.mxu0
  %v914 = vadd.f32 %v131, %v913
  %v915 = vpop.f32.mrf.mxu0
  %916 = vdwg.mxu0
  %v917 = vxor.u32 %v914, 2147483648
  %v918 = vmul.f32 %v917, 1.442695
  %v919 = vpow.pop %v918
  %v920 = vadd.f32 %v919, 1.0
  %v921 = vrcp.pop %v920
  %v922 = vmul.f32 %v920, %v921
  %v923 = vsub.f32 1.0, %v922
  %v924 = vmul.f32 %v921, %v923
  %v925 = vadd.f32 %v921, %v924
  %vm926 = vweird.f32 %v920
  %vm927 = vweird.f32 %v921
  %vm928 = vmor %vm926, %vm927
  %v929 = vsel %vm928, %v921, %v925
  %v930 = vand.u32 2147483647, %v920
  %vm931 = vcmp.eq.f32.partialorder %v930, 8.507059e+37
  %v932 = vand.u32 %v920, 2147483648
  %v933 = vor.u32 1.1754944e-38, %v932
  %v934 = vsel %vm931, %v933, %v929
  %v935 = vmul.f32 1.0, %v934
  %v936 = vtanh.pop %v914
  %v937 = vmul.f32 %v935, %v823
  %939 = vrot.lane.b32.xlu0 %v936, 64
  %v940 = vpop.permute.xlu0 %939
  %v942 = vmul.f32 %v935, %v940
  %944 = vrot.lane.b32.xlu0 %v942, 32
  %v945 = vpop.permute.xlu0 %944
  %v947 = vadd.f32 %v937, %v945
  %v948 = vtanh.pop %v947
  %950 = vrot.lane.b32.xlu0 %v948, 64
  %v951 = vpop.permute.xlu0 %950
  %v953 = vmul.f32 %v935, %v951
  %954 = vrot.lane.b32.xlu0 %v583, 32
  %v955 = vpop.permute.xlu0 %954
  %957 = vrot.lane.b32.xlu0 %v890, 64
  %v958 = vpop.permute.xlu0 %957
  %v960 = vsel %vm40, %v955, %v958
  %v961 = vpack.c.bf16 %v960, %v960
  %v963 = vsel %vm70, %v961, 0
  %965 = vmatpush.bf16.msra.mxu0 0
  %966 = vmatpush.bf16.msra.mxu0 0
  %967 = vmatpush.bf16.msra.mxu0 0
  %968 = vmatpush.bf16.msra.mxu0 0
  %969 = vmatpush.bf16.msra.mxu0 %v65
  %970 = vmatpush.bf16.msra.mxu0 %v64
  %971 = vmatpush.bf16.msra.mxu0 %v63
  %972 = vmatpush.bf16.msra.mxu0 %v62
  %973 = vmatmul.bf16.gmra.mxu0 %v963
  %v974 = vpop.f32.mrf.mxu0
  %v975 = vadd.f32 %v44, %v974
  %v976 = vpop.f32.mrf.mxu0
  %977 = vdwg.mxu0
  %v978 = vxor.u32 %v975, 2147483648
  %v979 = vmul.f32 %v978, 1.442695
  %v980 = vpow.pop %v979
  %v981 = vadd.f32 %v980, 1.0
  %v982 = vrcp.pop %v981
  %v983 = vmul.f32 %v981, %v982
  %v984 = vsub.f32 1.0, %v983
  %v985 = vmul.f32 %v982, %v984
  %v986 = vadd.f32 %v982, %v985
  %vm987 = vweird.f32 %v981
  %vm988 = vweird.f32 %v982
  %vm989 = vmor %vm987, %vm988
  %v990 = vsel %vm989, %v982, %v986
  %v991 = vand.u32 2147483647, %v981
  %vm992 = vcmp.eq.f32.partialorder %v991, 8.507059e+37
  %v993 = vand.u32 %v981, 2147483648
  %v994 = vor.u32 1.1754944e-38, %v993
  %v995 = vsel %vm992, %v994, %v990
  %v996 = vmul.f32 1.0, %v995
  %v997 = vtanh.pop %v975
  %v998 = vmul.f32 %v996, %v884
  %1000 = vrot.lane.b32.xlu0 %v997, 64
  %v1001 = vpop.permute.xlu0 %1000
  %v1003 = vmul.f32 %v996, %v1001
  %1005 = vrot.lane.b32.xlu0 %v1003, 32
  %v1006 = vpop.permute.xlu0 %1005
  %v1008 = vadd.f32 %v998, %v1006
  %v1009 = vtanh.pop %v1008
  %1011 = vrot.lane.b32.xlu0 %v1009, 64
  %v1012 = vpop.permute.xlu0 %1011
  %v1014 = vmul.f32 %v996, %v1012
  %1016 = vrot.lane.b32.xlu0 %v1014, 32
  %v1017 = vpop.permute.xlu0 %1016
  %1020 = vrot.lane.b32.xlu0 %v953, 64
  %v1021 = vpop.permute.xlu0 %1020
  %v1023 = vsel %vm40, %v1017, %v1021
  %v1024 = vpack.c.bf16 %v1023, %v1023
  %v1026 = vsel %vm70, %v1024, 0
  %1028 = vmatpush.bf16.msra.mxu0 0
  %1029 = vmatpush.bf16.msra.mxu0 0
  %1030 = vmatpush.bf16.msra.mxu0 0
  %1031 = vmatpush.bf16.msra.mxu0 0
  %1032 = vmatpush.bf16.msra.mxu0 %v152
  %1033 = vmatpush.bf16.msra.mxu0 %v151
  %1034 = vmatpush.bf16.msra.mxu0 %v150
  %1035 = vmatpush.bf16.msra.mxu0 %v149
  %1036 = vmatmul.bf16.gmra.mxu0 %v1026
  %v1037 = vpop.f32.mrf.mxu0
  %v1038 = vadd.f32 %v131, %v1037
  %v1039 = vpop.f32.mrf.mxu0
  %1040 = vdwg.mxu0
  %v1041 = vxor.u32 %v1038, 2147483648
  %v1042 = vmul.f32 %v1041, 1.442695
  %v1043 = vpow.pop %v1042
  %v1044 = vadd.f32 %v1043, 1.0
  %v1045 = vrcp.pop %v1044
  %v1046 = vmul.f32 %v1044, %v1045
  %v1047 = vsub.f32 1.0, %v1046
  %v1048 = vmul.f32 %v1045, %v1047
  %v1049 = vadd.f32 %v1045, %v1048
  %vm1050 = vweird.f32 %v1044
  %vm1051 = vweird.f32 %v1045
  %vm1052 = vmor %vm1050, %vm1051
  %v1053 = vsel %vm1052, %v1045, %v1049
  %v1054 = vand.u32 2147483647, %v1044
  %vm1055 = vcmp.eq.f32.partialorder %v1054, 8.507059e+37
  %v1056 = vand.u32 %v1044, 2147483648
  %v1057 = vor.u32 1.1754944e-38, %v1056
  %v1058 = vsel %vm1055, %v1057, %v1053
  %v1059 = vmul.f32 1.0, %v1058
  %v1060 = vtanh.pop %v1038
  %v1061 = vmul.f32 %v1059, %v947
  %1063 = vrot.lane.b32.xlu0 %v1060, 64
  %v1064 = vpop.permute.xlu0 %1063
  %v1066 = vmul.f32 %v1059, %v1064
  %1068 = vrot.lane.b32.xlu0 %v1066, 32
  %v1069 = vpop.permute.xlu0 %1068
  %v1071 = vadd.f32 %v1061, %v1069
  %v1072 = vtanh.pop %v1071
  %1074 = vrot.lane.b32.xlu0 %v1072, 64
  %v1075 = vpop.permute.xlu0 %1074
  %v1077 = vmul.f32 %v1059, %v1075
  %1079 = vrot.lane.b32.xlu0 %v1077, 64
  %v1080 = vpop.permute.xlu0 %1079
  %1083 = vrot.lane.b32.xlu0 %v1008, 32
  %v1084 = vpop.permute.xlu0 %1083
  %1087 = vrot.lane.b32.xlu0 %v1071, 64
  %v1088 = vpop.permute.xlu0 %1087
  %v1090 = vsel %vm40, %v1017, %v1080
  %v1091 = vsel %vm70, %v1090, %v1084
  %vm1092 = vcmask 785408
  %v1093 = vsel %vm1092, %v1091, %v1088
  %1094 = vst [vmem:[%s5] sm:$0xff] %v1093
  // Predicated region
  $region22: #{encoder_forward.1} parent=0 // pred_check
    _
  $region23: #{encoder_forward.1} parent=0 // pred_check_branch
    %1096 = sbr.rel (0) target = $region25
  $region24: #{encoder_forward.1} parent=0 // pred_region
    _
  $region25: #{encoder_forward.1} parent=0 // pred_fallthru
    _
  // Predicated region
  $region26: #{encoder_forward.1} parent=0 // pred_check
    _
  $region27: #{encoder_forward.1} parent=0 // pred_check_branch
    %1098 = sbr.rel (0) target = $region29
  $region28: #{encoder_forward.1} parent=0 // pred_region
    _
  $region29: #{encoder_forward.1} parent=0 // pred_fallthru
    _

</llo_original>
